<compile_context>
chip_gen: v5e
topology: v5e:2x2
jax: 0.10.0
libtpu: 0.0.40
codegen_flags: <defaults>
</compile_context>

<pallas_src>
import jax
import jax.numpy as jnp
import numpy as np
from jax import lax
from jax.experimental import pallas as pl
from jax.experimental.pallas import tpu as pltpu


# --------------------------------------------------------------------------
# Kernel
# --------------------------------------------------------------------------
def _kw_head_kernel(x_ref,      # VMEM: (BB, BT, D_in) f32
                    len_ref,    # VMEM: (BB, 1) int32
                    wpre_ref,   # VMEM: (D_in, D_out) f32
                    bpre_ref,   # VMEM: (1, D_out) f32
                    wpost_ref,  # VMEM: (D_out, D_out) f32
                    bpost_ref,  # VMEM: (1, D_out) f32
                    o_ref,      # VMEM: (BB, D_out) f32
                    acc_ref):   # VMEM scratch: (BB, D_in) f32
    t = pl.program_id(1)
    bb, block_t, d_in = x_ref.shape

    @pl.when(t == 0)
    def _():
        acc_ref[...] = jnp.zeros_like(acc_ref)

    n = len_ref[...]                                          # (BB, 1) int32
    # Valid-time mask for this T-chunk, built directly in the 3-D layout
    # (iota over the sublane axis).  Out-of-range/padded time rows have
    # t_ids >= T >= len, so they are always masked out.
    t_ids = lax.broadcasted_iota(jnp.int32, (bb, block_t, d_in), 1) + t * block_t
    mask = t_ids < n[:, :, None]                              # (BB, BT, D_in)
    # Streaming masked sum over time; the 1/len scale is deferred to finalize.
    acc_ref[...] += jnp.sum(jnp.where(mask, x_ref[...], 0.0), axis=1)

    @pl.when(t == pl.num_programs(1) - 1)
    def _():
        # mean(x W_pre + b_pre) == mean(x) W_pre + b_pre, so project the pooled
        # (BB, D_in) row block once instead of a (T, D_in) matmul per row.
        pooled = acc_ref[...] / jnp.maximum(n, 1).astype(jnp.float32)   # (BB, D_in)
        h = jnp.dot(pooled, wpre_ref[...],
                    preferred_element_type=jnp.float32) + bpre_ref[...]
        out = jnp.dot(h, wpost_ref[...],
                      preferred_element_type=jnp.float32) + bpost_ref[...]
        o_ref[...] = out.astype(o_ref.dtype)


# --------------------------------------------------------------------------
# Tile planning (generation-aware)
# --------------------------------------------------------------------------
def _scoped_vmem_budget():
    try:
        cap = int(pltpu.get_tpu_info().vmem_capacity_bytes)
    except Exception:
        cap = 64 * 1024 * 1024        # conservative default: v7x physical VMEM
    # Leave headroom for compiler-internal scratch; cap the scoped request.
    return min(3 * cap // 4, 96 * 1024 * 1024)


def _plan_tiles(B, T, D_in, D_out, scoped_vmem):
    """Pick (block_b, block_t) so all live buffers fit the scoped VMEM budget."""
    f32 = 4
    # Worst case: weights double-buffered (in case pl.Buffered(1) is unsupported).
    fixed = 2 * (D_in * D_out + D_out * D_out + 2 * D_out) * f32
    avail = max(int(scoped_vmem * 0.85) - fixed, 1 << 20)

    def tile_bytes(bb, bt):
        return (2 * bb * bt * D_in * f32      # x tile (double-buffered)
                + 2 * bb * f32                # lens tile
                + 2 * bb * D_out * f32        # output tile
                + bb * D_in * f32)            # f32 accumulator scratch

    bt_min = min(T, 8)

    # Batch tile: multiple of 8 (sublane-dense stores), prefer a divisor of B
    # (no ragged tail / no HBM pad) and >= 2 steps on the parallel axis so both
    # v7x TensorCores get work.  HBM-bound kernel -> no artificial 128 cap.
    if B <= 8:
        block_b = B
        # TODO(synk): single parallel step for tiny B; splitting T across the
        # parallel axis would need per-step partial outputs + a reduce.
    else:
        cap = min(B - B % 8, 1024)
        cands = list(range(8, cap + 1, 8))
        fit = [bb for bb in cands if tile_bytes(bb, bt_min) <= avail] or [8]
        two_step = [bb for bb in fit if bb <= pl.cdiv(B, 2)]
        pool = two_step or fit
        divisors = [bb for bb in pool if B % bb == 0]
        block_b = max(divisors) if divisors else max(pool)

    # Time tile: as large as the remaining budget allows (multiple of 8, or the
    # full T).  Non-dividing tiles are fine: padded time rows are len-masked.
    if T <= 8:
        bt_cands = [T]
    else:
        bt_cands = sorted({T} | set(range(8, T + 1, 8)), reverse=True)
    block_t = next((bt for bt in bt_cands if tile_bytes(block_b, bt) <= avail),
                   bt_cands[-1])
    return block_b, block_t


# --------------------------------------------------------------------------
# pallas_call wrapper
# --------------------------------------------------------------------------
def _build_call(B, T, D_in, D_out, block_b, block_t, vmem_limit, cost,
                single_buffer_weights):
    grid = (pl.cdiv(B, block_b), pl.cdiv(T, block_t))
    const_kw = ({"pipeline_mode": pl.Buffered(1)}
                if single_buffer_weights else {})

    def const_spec(shape):
        # Grid-invariant operand (weights / biases): constant index_map.
        return pl.BlockSpec(shape, lambda i, t: (0, 0), **const_kw)

    return pl.pallas_call(
        _kw_head_kernel,
        out_shape=jax.ShapeDtypeStruct((B, D_out), jnp.float32),
        grid=grid,
        in_specs=[
            pl.BlockSpec((block_b, block_t, D_in), lambda i, t: (i, t, 0)),
            pl.BlockSpec((block_b, 1), lambda i, t: (i, 0)),
            const_spec((D_in, D_out)),
            const_spec((1, D_out)),
            const_spec((D_out, D_out)),
            const_spec((1, D_out)),
        ],
        out_specs=pl.BlockSpec((block_b, D_out), lambda i, t: (i, 0)),
        scratch_shapes=[pltpu.VMEM((block_b, D_in), jnp.float32)],
        compiler_params=pltpu.CompilerParams(
            dimension_semantics=("parallel", "arbitrary"),
            vmem_limit_bytes=int(vmem_limit),
        ),
        cost_estimate=cost,
    )


def kw_parallel_branch_head(x, x_len, w_pre, b_pre, w_post, b_post,
                            *, block_b=None, block_t=None):
    """x: (B, T, D_in) f32, x_len: (B,) int.  Returns (B, D_out) f32."""
    B, T, D_in = x.shape
    D_out = w_pre.shape[1]

    x = jnp.asarray(x, jnp.float32)
    lens = jnp.asarray(x_len, jnp.int32).reshape(B, 1)
    w_pre = jnp.asarray(w_pre, jnp.float32)
    w_post = jnp.asarray(w_post, jnp.float32)
    b_pre = jnp.asarray(b_pre, jnp.float32).reshape(1, D_out)
    b_post = jnp.asarray(b_post, jnp.float32).reshape(1, D_out)

    scoped = _scoped_vmem_budget()
    auto_bb, auto_bt = _plan_tiles(B, T, D_in, D_out, scoped)
    block_b = auto_bb if block_b is None else block_b
    block_t = auto_bt if block_t is None else block_t

    # TODO(synk): if production D_in/D_out are not multiples of 128, pad the
    # feature dims at weight-prep time (lane-dense stores) and slice the output.
    cost = pl.CostEstimate(
        flops=2 * B * (D_in + D_out) * D_out,
        transcendentals=0,
        bytes_accessed=4 * (B * T * D_in + B + B * D_out
                            + D_in * D_out + D_out * D_out + 2 * D_out),
    )

    args = (x, lens, w_pre, b_pre, w_post, b_post)
    try:
        return _build_call(B, T, D_in, D_out, block_b, block_t, scoped, cost,
                           single_buffer_weights=True)(*args)
    except Exception:
        # pl.Buffered(1) single-buffering of grid-invariant weights is not
        # available in every jax release; fall back to default double buffers.
        return _build_call(B, T, D_in, D_out, block_b, block_t, scoped, cost,
                           single_buffer_weights=False)(*args)


# --------------------------------------------------------------------------
# Pure-JAX reference (project -> masked mean -> project)
# --------------------------------------------------------------------------
def _reference(x, x_len, w_pre, b_pre, w_post, b_post):
    h = jnp.einsum("btd,de->bte", x, w_pre) + jnp.reshape(b_pre, (1, 1, -1))
    T = x.shape[1]
    mask = (jnp.arange(T)[None, :] < x_len[:, None]).astype(h.dtype)
    denom = jnp.maximum(x_len, 1).astype(h.dtype)[:, None]
    pooled = jnp.sum(h * mask[..., None], axis=1) / denom
    return pooled @ w_post + jnp.reshape(b_post, (1, -1))


if __name__ == "__main__":
    # Small shapes consistent with the module's (batch, time, feature) layout.
    B, T, D_in, D_out = 16, 16, 32, 32

    key = jax.random.PRNGKey(0)
    k_x, k_len, k_wpre, k_bpre, k_wpost, k_bpost = jax.random.split(key, 6)

    x = jax.random.normal(k_x, (B, T, D_in), dtype=jnp.float32)
    x_len = jax.random.randint(k_len, (B,), 1, T + 1).astype(jnp.int32)

    # nn.Linear(in, out) parameters, stored transposed as (in, out).
    w_pre = jax.random.normal(k_wpre, (D_in, D_out), dtype=jnp.float32) * 0.1
    b_pre = jax.random.normal(k_bpre, (1, D_out), dtype=jnp.float32) * 0.1
    w_post = jax.random.normal(k_wpost, (D_out, D_out), dtype=jnp.float32) * 0.1
    b_post = jax.random.normal(k_bpost, (1, D_out), dtype=jnp.float32) * 0.1

    ref = _reference(x, x_len, w_pre, b_pre, w_post, b_post)

    # 1) Auto tile plan (block_t == T here -> single time step).
    out = jax.block_until_ready(
        kw_parallel_branch_head(x, x_len, w_pre, b_pre, w_post, b_post))
    np.testing.assert_allclose(np.asarray(out), np.asarray(ref),
                               rtol=1e-5, atol=1e-5)

    # 2) Force the T grid axis (block_t < T) to exercise the accumulator path.
    out2 = jax.block_until_ready(
        kw_parallel_branch_head(x, x_len, w_pre, b_pre, w_post, b_post,
                                block_b=8, block_t=8))
    np.testing.assert_allclose(np.asarray(out2), np.asarray(ref),
                               rtol=1e-5, atol=1e-5)

    # 3) Ragged batch (B=12, not a multiple of the 8-row batch tile): no
    #    jnp.pad — the partial last block's out-of-range rows are dropped.
    out3 = jax.block_until_ready(
        kw_parallel_branch_head(x[:12], x_len[:12],
                                w_pre, b_pre, w_post, b_post))
    np.testing.assert_allclose(np.asarray(out3), np.asarray(ref[:12]),
                               rtol=1e-5, atol=1e-5)

    print("KERNEL_OK")
</pallas_src>

<mosaic_0001>
module attributes {stable_mosaic.version = 11 : i64} {
  func.func @_kw_head_kernel(%arg0: i32, %arg1: i32, %arg2: memref<8x16x32xf32, #tpu.memory_space<vmem>>, %arg3: memref<8x1xi32, #tpu.memory_space<vmem>>, %arg4: memref<32x32xf32, #tpu.memory_space<vmem>>, %arg5: memref<1x32xf32, #tpu.memory_space<vmem>>, %arg6: memref<32x32xf32, #tpu.memory_space<vmem>>, %arg7: memref<1x32xf32, #tpu.memory_space<vmem>>, %arg8: memref<8x32xf32, #tpu.memory_space<vmem>>, %arg9: memref<8x32xf32, #tpu.memory_space<vmem>>) attributes {dimension_semantics = [#tpu.dimension_semantics<parallel>, #tpu.dimension_semantics<arbitrary>], iteration_bounds = array<i64: 2, 1>, scalar_prefetch = 0 : i64, scratch_operands = 1 : i64, tpu.core_type = #tpu.core_type<tc>, window_params = [{transform_indices = @transform_0, window_bounds = array<i64: 8, 16, 32>}, {transform_indices = @transform_1, window_bounds = array<i64: 8, 1>}, {pipeline_mode = #tpu.pipeline_mode<synchronous>, transform_indices = @transform_2, window_bounds = array<i64: 32, 32>}, {pipeline_mode = #tpu.pipeline_mode<synchronous>, transform_indices = @transform_3, window_bounds = array<i64: 1, 32>}, {pipeline_mode = #tpu.pipeline_mode<synchronous>, transform_indices = @transform_4, window_bounds = array<i64: 32, 32>}, {pipeline_mode = #tpu.pipeline_mode<synchronous>, transform_indices = @transform_5, window_bounds = array<i64: 1, 32>}, {transform_indices = @transform_6, window_bounds = array<i64: 8, 32>}]} {
    %c0_i32 = arith.constant 0 : i32
    %0 = arith.cmpi eq, %arg1, %c0_i32 : i32
    %1 = arith.extui %0 : i1 to i32
    %c0_i32_0 = arith.constant 0 : i32
    %2 = arith.cmpi ne, %1, %c0_i32_0 : i32
    scf.if %2 {
      %cst_12 = arith.constant 0.000000e+00 : f32
      %21 = vector.broadcast %cst_12 : f32 to vector<8x32xf32>
      %c0_13 = arith.constant 0 : index
      %c0_14 = arith.constant 0 : index
      %22 = vector.load %arg9[%c0_13, %c0_14] : memref<8x32xf32, #tpu.memory_space<vmem>>, vector<8x32xf32>
      tpu.vector_store %arg9[%c0_13, %c0_14], %21 {strides = array<i32>} : memref<8x32xf32, #tpu.memory_space<vmem>>, vector<8x32xf32>,
    } else {
    }
    %c0 = arith.constant 0 : index
    %c0_1 = arith.constant 0 : index
    %3 = vector.load %arg3[%c0, %c0_1] : memref<8x1xi32, #tpu.memory_space<vmem>>, vector<8x1xi32>
    %4 = tpu.iota {dimensions = array<i32: 1>} : vector<8x16x32xi32>
    %c16_i32 = arith.constant 16 : i32
    %5 = arith.muli %arg1, %c16_i32 : i32
    %6 = vector.broadcast %5 : i32 to vector<8x16x32xi32>
    %7 = arith.addi %4, %6 : vector<8x16x32xi32>
    %8 = vector.shape_cast %3 : vector<8x1xi32> to vector<8x1x1xi32>
    %9 = vector.broadcast %8 : vector<8x1x1xi32> to vector<8x16x32xi32>
    %10 = arith.cmpi slt, %7, %9 : vector<8x16x32xi32>
    %c0_2 = arith.constant 0 : index
    %c0_3 = arith.constant 0 : index
    %11 = vector.load %arg9[%c0_2, %c0_3] : memref<8x32xf32, #tpu.memory_space<vmem>>, vector<8x32xf32>
    %c0_4 = arith.constant 0 : index
    %c0_5 = arith.constant 0 : index
    %c0_6 = arith.constant 0 : index
    %12 = vector.load %arg2[%c0_4, %c0_5, %c0_6] : memref<8x16x32xf32, #tpu.memory_space<vmem>>, vector<8x16x32xf32>
    %cst = arith.constant 0.000000e+00 : f32
    %13 = vector.broadcast %cst : f32 to vector<8x16x32xf32>
    %14 = arith.select %10, %12, %13 : vector<8x16x32xi1>, vector<8x16x32xf32>
    %cst_7 = arith.constant dense<0.000000e+00> : vector<8x32xf32>
    %15 = vector.multi_reduction <add>, %14, %cst_7 [1] : vector<8x16x32xf32> to vector<8x32xf32>
    %16 = arith.addf %11, %15 : vector<8x32xf32>
    %c0_8 = arith.constant 0 : index
    %c0_9 = arith.constant 0 : index
    %17 = vector.load %arg9[%c0_8, %c0_9] : memref<8x32xf32, #tpu.memory_space<vmem>>, vector<8x32xf32>
    tpu.vector_store %arg9[%c0_8, %c0_9], %16 {strides = array<i32>} : memref<8x32xf32, #tpu.memory_space<vmem>>, vector<8x32xf32>,
    %c0_i32_10 = arith.constant 0 : i32
    %18 = arith.cmpi eq, %arg1, %c0_i32_10 : i32
    %19 = arith.extui %18 : i1 to i32
    %c0_i32_11 = arith.constant 0 : i32
    %20 = arith.cmpi ne, %19, %c0_i32_11 : i32
    scf.if %20 {
      %c0_12 = arith.constant 0 : index
      %c0_13 = arith.constant 0 : index
      %21 = vector.load %arg9[%c0_12, %c0_13] : memref<8x32xf32, #tpu.memory_space<vmem>>, vector<8x32xf32>
      %c1_i32 = arith.constant 1 : i32
      %22 = vector.broadcast %c1_i32 : i32 to vector<8x1xi32>
      %23 = arith.maxsi %3, %22 : vector<8x1xi32>
      %24 = arith.sitofp %23 : vector<8x1xi32> to vector<8x1xf32>
      %25 = vector.broadcast %24 : vector<8x1xf32> to vector<8x32xf32>
      %26 = arith.divf %21, %25 : vector<8x32xf32>
      %c0_14 = arith.constant 0 : index
      %c0_15 = arith.constant 0 : index
      %27 = vector.load %arg4[%c0_14, %c0_15] : memref<32x32xf32, #tpu.memory_space<vmem>>, vector<32x32xf32>
      %cst_16 = arith.constant dense<0.000000e+00> : vector<8x32xf32>
      %28 = tpu.matmul %26, %27, %cst_16 {dimension_numbers = #tpu.dot_dimension_numbers<[1], [0], [0], [1], [0, 0, 1, 1], [], []>} : vector<8x32xf32>, vector<32x32xf32>, vector<8x32xf32> -> vector<8x32xf32>
      %c0_17 = arith.constant 0 : index
      %c0_18 = arith.constant 0 : index
      %29 = vector.load %arg5[%c0_17, %c0_18] : memref<1x32xf32, #tpu.memory_space<vmem>>, vector<1x32xf32>
      %30 = vector.broadcast %29 : vector<1x32xf32> to vector<8x32xf32>
      %31 = arith.addf %28, %30 : vector<8x32xf32>
      %c0_19 = arith.constant 0 : index
      %c0_20 = arith.constant 0 : index
      %32 = vector.load %arg6[%c0_19, %c0_20] : memref<32x32xf32, #tpu.memory_space<vmem>>, vector<32x32xf32>
      %cst_21 = arith.constant dense<0.000000e+00> : vector<8x32xf32>
      %33 = tpu.matmul %31, %32, %cst_21 {dimension_numbers = #tpu.dot_dimension_numbers<[1], [0], [0], [1], [0, 0, 1, 1], [], []>} : vector<8x32xf32>, vector<32x32xf32>, vector<8x32xf32> -> vector<8x32xf32>
      %c0_22 = arith.constant 0 : index
      %c0_23 = arith.constant 0 : index
      %34 = vector.load %arg7[%c0_22, %c0_23] : memref<1x32xf32, #tpu.memory_space<vmem>>, vector<1x32xf32>
      %35 = vector.broadcast %34 : vector<1x32xf32> to vector<8x32xf32>
      %36 = arith.addf %33, %35 : vector<8x32xf32>
      %c0_24 = arith.constant 0 : index
      %c0_25 = arith.constant 0 : index
      %37 = vector.load %arg8[%c0_24, %c0_25] : memref<8x32xf32, #tpu.memory_space<vmem>>, vector<8x32xf32>
      tpu.vector_store %arg8[%c0_24, %c0_25], %36 {strides = array<i32>} : memref<8x32xf32, #tpu.memory_space<vmem>>, vector<8x32xf32>,
    } else {
    }
    return
  }
  func.func @transform_0(%arg0: i32, %arg1: i32) -> (i32, i32, i32) {
    %c0_i32 = arith.constant 0 : i32
    %c0_i32_0 = arith.constant 0 : i32
    return %arg0, %arg1, %c0_i32 : i32, i32, i32
  }
  func.func @transform_1(%arg0: i32, %arg1: i32) -> (i32, i32) {
    %c0_i32 = arith.constant 0 : i32
    %c0_i32_0 = arith.constant 0 : i32
    return %arg0, %c0_i32 : i32, i32
  }
  func.func @transform_2(%arg0: i32, %arg1: i32) -> (i32, i32) {
    %c0_i32 = arith.constant 0 : i32
    %c0_i32_0 = arith.constant 0 : i32
    %c0_i32_1 = arith.constant 0 : i32
    return %c0_i32, %c0_i32_0 : i32, i32
  }
  func.func @transform_3(%arg0: i32, %arg1: i32) -> (i32, i32) {
    %c0_i32 = arith.constant 0 : i32
    %c0_i32_0 = arith.constant 0 : i32
    %c0_i32_1 = arith.constant 0 : i32
    return %c0_i32, %c0_i32_0 : i32, i32
  }
  func.func @transform_4(%arg0: i32, %arg1: i32) -> (i32, i32) {
    %c0_i32 = arith.constant 0 : i32
    %c0_i32_0 = arith.constant 0 : i32
    %c0_i32_1 = arith.constant 0 : i32
    return %c0_i32, %c0_i32_0 : i32, i32
  }
  func.func @transform_5(%arg0: i32, %arg1: i32) -> (i32, i32) {
    %c0_i32 = arith.constant 0 : i32
    %c0_i32_0 = arith.constant 0 : i32
    %c0_i32_1 = arith.constant 0 : i32
    return %c0_i32, %c0_i32_0 : i32, i32
  }
  func.func @transform_6(%arg0: i32, %arg1: i32) -> (i32, i32) {
    %c0_i32 = arith.constant 0 : i32
    %c0_i32_0 = arith.constant 0 : i32
    return %arg0, %c0_i32 : i32, i32
  }
}

module attributes {stable_mosaic.version = 11 : i64} {
  func.func @_kw_head_kernel(%arg0: i32, %arg1: i32, %arg2: memref<8x16x32xf32, #tpu.memory_space<vmem>>, %arg3: memref<8x1xi32, #tpu.memory_space<vmem>>, %arg4: memref<32x32xf32, #tpu.memory_space<vmem>>, %arg5: memref<1x32xf32, #tpu.memory_space<vmem>>, %arg6: memref<32x32xf32, #tpu.memory_space<vmem>>, %arg7: memref<1x32xf32, #tpu.memory_space<vmem>>, %arg8: memref<8x32xf32, #tpu.memory_space<vmem>>, %arg9: memref<8x32xf32, #tpu.memory_space<vmem>>) attributes {dimension_semantics = [#tpu.dimension_semantics<parallel>, #tpu.dimension_semantics<arbitrary>], iteration_bounds = array<i64: 2, 1>, scalar_prefetch = 0 : i64, scratch_operands = 1 : i64, tpu.core_type = #tpu.core_type<tc>, window_params = [{transform_indices = @transform_0, window_bounds = array<i64: 8, 16, 32>}, {transform_indices = @transform_1, window_bounds = array<i64: 8, 1>}, {pipeline_mode = #tpu.pipeline_mode<synchronous>, transform_indices = @transform_2, window_bounds = array<i64: 32, 32>}, {pipeline_mode = #tpu.pipeline_mode<synchronous>, transform_indices = @transform_3, window_bounds = array<i64: 1, 32>}, {pipeline_mode = #tpu.pipeline_mode<synchronous>, transform_indices = @transform_4, window_bounds = array<i64: 32, 32>}, {pipeline_mode = #tpu.pipeline_mode<synchronous>, transform_indices = @transform_5, window_bounds = array<i64: 1, 32>}, {transform_indices = @transform_6, window_bounds = array<i64: 8, 32>}]} {
    %c0_i32 = arith.constant 0 : i32
    %0 = arith.cmpi eq, %arg1, %c0_i32 : i32
    %1 = arith.extui %0 : i1 to i32
    %c0_i32_0 = arith.constant 0 : i32
    %2 = arith.cmpi ne, %1, %c0_i32_0 : i32
    scf.if %2 {
      %cst_12 = arith.constant 0.000000e+00 : f32
      %21 = vector.broadcast %cst_12 : f32 to vector<8x32xf32>
      %c0_13 = arith.constant 0 : index
      %c0_14 = arith.constant 0 : index
      %22 = vector.load %arg9[%c0_13, %c0_14] : memref<8x32xf32, #tpu.memory_space<vmem>>, vector<8x32xf32>
      tpu.vector_store %arg9[%c0_13, %c0_14], %21 {strides = array<i32>} : memref<8x32xf32, #tpu.memory_space<vmem>>, vector<8x32xf32>,
    } else {
    }
    %c0 = arith.constant 0 : index
    %c0_1 = arith.constant 0 : index
    %3 = vector.load %arg3[%c0, %c0_1] : memref<8x1xi32, #tpu.memory_space<vmem>>, vector<8x1xi32>
    %4 = tpu.iota {dimensions = array<i32: 1>} : vector<8x16x32xi32>
    %c16_i32 = arith.constant 16 : i32
    %5 = arith.muli %arg1, %c16_i32 : i32
    %6 = vector.broadcast %5 : i32 to vector<8x16x32xi32>
    %7 = arith.addi %4, %6 : vector<8x16x32xi32>
    %8 = vector.shape_cast %3 : vector<8x1xi32> to vector<8x1x1xi32>
    %9 = vector.broadcast %8 : vector<8x1x1xi32> to vector<8x16x32xi32>
    %10 = arith.cmpi slt, %7, %9 : vector<8x16x32xi32>
    %c0_2 = arith.constant 0 : index
    %c0_3 = arith.constant 0 : index
    %11 = vector.load %arg9[%c0_2, %c0_3] : memref<8x32xf32, #tpu.memory_space<vmem>>, vector<8x32xf32>
    %c0_4 = arith.constant 0 : index
    %c0_5 = arith.constant 0 : index
    %c0_6 = arith.constant 0 : index
    %12 = vector.load %arg2[%c0_4, %c0_5, %c0_6] : memref<8x16x32xf32, #tpu.memory_space<vmem>>, vector<8x16x32xf32>
    %cst = arith.constant 0.000000e+00 : f32
    %13 = vector.broadcast %cst : f32 to vector<8x16x32xf32>
    %14 = arith.select %10, %12, %13 : vector<8x16x32xi1>, vector<8x16x32xf32>
    %cst_7 = arith.constant dense<0.000000e+00> : vector<8x32xf32>
    %15 = vector.multi_reduction <add>, %14, %cst_7 [1] : vector<8x16x32xf32> to vector<8x32xf32>
    %16 = arith.addf %11, %15 : vector<8x32xf32>
    %c0_8 = arith.constant 0 : index
    %c0_9 = arith.constant 0 : index
    %17 = vector.load %arg9[%c0_8, %c0_9] : memref<8x32xf32, #tpu.memory_space<vmem>>, vector<8x32xf32>
    tpu.vector_store %arg9[%c0_8, %c0_9], %16 {strides = array<i32>} : memref<8x32xf32, #tpu.memory_space<vmem>>, vector<8x32xf32>,
    %c0_i32_10 = arith.constant 0 : i32
    %18 = arith.cmpi eq, %arg1, %c0_i32_10 : i32
    %19 = arith.extui %18 : i1 to i32
    %c0_i32_11 = arith.constant 0 : i32
    %20 = arith.cmpi ne, %19, %c0_i32_11 : i32
    scf.if %20 {
      %c0_12 = arith.constant 0 : index
      %c0_13 = arith.constant 0 : index
      %21 = vector.load %arg9[%c0_12, %c0_13] : memref<8x32xf32, #tpu.memory_space<vmem>>, vector<8x32xf32>
      %c1_i32 = arith.constant 1 : i32
      %22 = vector.broadcast %c1_i32 : i32 to vector<8x1xi32>
      %23 = arith.maxsi %3, %22 : vector<8x1xi32>
      %24 = arith.sitofp %23 : vector<8x1xi32> to vector<8x1xf32>
      %25 = vector.broadcast %24 : vector<8x1xf32> to vector<8x32xf32>
      %26 = arith.divf %21, %25 : vector<8x32xf32>
      %c0_14 = arith.constant 0 : index
      %c0_15 = arith.constant 0 : index
      %27 = vector.load %arg4[%c0_14, %c0_15] : memref<32x32xf32, #tpu.memory_space<vmem>>, vector<32x32xf32>
      %cst_16 = arith.constant dense<0.000000e+00> : vector<8x32xf32>
      %28 = tpu.matmul %26, %27, %cst_16 {dimension_numbers = #tpu.dot_dimension_numbers<[1], [0], [0], [1], [0, 0, 1, 1], [], []>} : vector<8x32xf32>, vector<32x32xf32>, vector<8x32xf32> -> vector<8x32xf32>
      %c0_17 = arith.constant 0 : index
      %c0_18 = arith.constant 0 : index
      %29 = vector.load %arg5[%c0_17, %c0_18] : memref<1x32xf32, #tpu.memory_space<vmem>>, vector<1x32xf32>
      %30 = vector.broadcast %29 : vector<1x32xf32> to vector<8x32xf32>
      %31 = arith.addf %28, %30 : vector<8x32xf32>
      %c0_19 = arith.constant 0 : index
      %c0_20 = arith.constant 0 : index
      %32 = vector.load %arg6[%c0_19, %c0_20] : memref<32x32xf32, #tpu.memory_space<vmem>>, vector<32x32xf32>
      %cst_21 = arith.constant dense<0.000000e+00> : vector<8x32xf32>
      %33 = tpu.matmul %31, %32, %cst_21 {dimension_numbers = #tpu.dot_dimension_numbers<[1], [0], [0], [1], [0, 0, 1, 1], [], []>} : vector<8x32xf32>, vector<32x32xf32>, vector<8x32xf32> -> vector<8x32xf32>
      %c0_22 = arith.constant 0 : index
      %c0_23 = arith.constant 0 : index
      %34 = vector.load %arg7[%c0_22, %c0_23] : memref<1x32xf32, #tpu.memory_space<vmem>>, vector<1x32xf32>
      %35 = vector.broadcast %34 : vector<1x32xf32> to vector<8x32xf32>
      %36 = arith.addf %33, %35 : vector<8x32xf32>
      %c0_24 = arith.constant 0 : index
      %c0_25 = arith.constant 0 : index
      %37 = vector.load %arg8[%c0_24, %c0_25] : memref<8x32xf32, #tpu.memory_space<vmem>>, vector<8x32xf32>
      tpu.vector_store %arg8[%c0_24, %c0_25], %36 {strides = array<i32>} : memref<8x32xf32, #tpu.memory_space<vmem>>, vector<8x32xf32>,
    } else {
    }
    return
  }
  func.func @transform_0(%arg0: i32, %arg1: i32) -> (i32, i32, i32) {
    %c0_i32 = arith.constant 0 : i32
    %c0_i32_0 = arith.constant 0 : i32
    return %arg0, %arg1, %c0_i32 : i32, i32, i32
  }
  func.func @transform_1(%arg0: i32, %arg1: i32) -> (i32, i32) {
    %c0_i32 = arith.constant 0 : i32
    %c0_i32_0 = arith.constant 0 : i32
    return %arg0, %c0_i32 : i32, i32
  }
  func.func @transform_2(%arg0: i32, %arg1: i32) -> (i32, i32) {
    %c0_i32 = arith.constant 0 : i32
    %c0_i32_0 = arith.constant 0 : i32
    %c0_i32_1 = arith.constant 0 : i32
    return %c0_i32, %c0_i32_0 : i32, i32
  }
  func.func @transform_3(%arg0: i32, %arg1: i32) -> (i32, i32) {
    %c0_i32 = arith.constant 0 : i32
    %c0_i32_0 = arith.constant 0 : i32
    %c0_i32_1 = arith.constant 0 : i32
    return %c0_i32, %c0_i32_0 : i32, i32
  }
  func.func @transform_4(%arg0: i32, %arg1: i32) -> (i32, i32) {
    %c0_i32 = arith.constant 0 : i32
    %c0_i32_0 = arith.constant 0 : i32
    %c0_i32_1 = arith.constant 0 : i32
    return %c0_i32, %c0_i32_0 : i32, i32
  }
  func.func @transform_5(%arg0: i32, %arg1: i32) -> (i32, i32) {
    %c0_i32 = arith.constant 0 : i32
    %c0_i32_0 = arith.constant 0 : i32
    %c0_i32_1 = arith.constant 0 : i32
    return %c0_i32, %c0_i32_0 : i32, i32
  }
  func.func @transform_6(%arg0: i32, %arg1: i32) -> (i32, i32) {
    %c0_i32 = arith.constant 0 : i32
    %c0_i32_0 = arith.constant 0 : i32
    return %arg0, %c0_i32 : i32, i32
  }
}

</mosaic_0001>

<llo_original>
// kernel: tpu_custom_call.1
$region0: #{tpu_custom_call.1}
  #allocation0 [shape = 'u32[]', space=smem, size = 0x4, offset = 0x4, fixed_abs, tag = 'smem constant byte address 0x4 - core index']
  #allocation1 [shape = 'u32[72,128]{1,0:T(1,128)}', space=vmem, size = 0x9000, scoped, tag = 'internal scratch']
  #allocation2 [shape = 'f32[8,32]{1,0:T(8,128)}', space=vmem, size = 0x1000, scoped, tag = 'scratch operand']
  %s0 = inlined_call_operand.hbm [shape: f32[16,16,32], index: 0, kind: input, shape index: {}]
  %s1 = inlined_call_operand.vmem [shape: s32[16,1], index: 1, kind: input, shape index: {}]
  %s2 = inlined_call_operand.hbm [shape: f32[32,32], index: 2, kind: input, shape index: {}]
  %s3 = inlined_call_operand.vmem [shape: f32[1,32], index: 3, kind: input, shape index: {}]
  %s4 = inlined_call_operand.hbm [shape: f32[32,32], index: 4, kind: input, shape index: {}]
  %s5 = inlined_call_operand.vmem [shape: f32[1,32], index: 5, kind: input, shape index: {}]
  %s6 = inlined_call_operand.hbm [shape: f32[16,32], index: 6, kind: output, shape index: {}]
  %s7 = sld [smem:[#allocation0]]
  $region77: #{tpu_custom_call.1} parent=0
    _
  %s9 = ssub.s32 1, %s7
  %s10 = scalar_select 0, %s9, %s7
  $region1: #{tpu_custom_call.1} parent=0
    #allocation3 [shape = 'u8[131072]{0}', space=vmem, size = 0x20000, scoped, tag = 'input window, operand 0']
    #allocation4 [shape = 's32[2]{0}', space=sflag, size = 0x8, scoped, tag = 'scoped memory for tpu_custom_call.1']
    #allocation5 [shape = 's32[2]{0}', space=sflag, size = 0x8, scoped, tag = 'scoped memory for tpu_custom_call.1']
    #allocation6 [shape = 'u8[16384]{0}', space=vmem, size = 0x4000, scoped, tag = 'input window, operand 2, single buffered']
    #allocation7 [shape = 's32[1]{0}', space=sflag, size = 0x4, scoped, tag = 'scoped memory for tpu_custom_call.1']
    #allocation8 [shape = 'u8[16384]{0}', space=vmem, size = 0x4000, scoped, tag = 'input window, operand 4, single buffered']
    #allocation9 [shape = 'u8[8192]{0}', space=vmem, size = 0x2000, scoped, tag = 'output window, operand 0']
    %11 = vsyncpa [#allocation4], 0
    %s12 = scalar_lea.sflag [#allocation4], 1
    %13 = vsyncpa %s12, 0
    %14 = vsyncpa [#allocation7], 0
    %15 = vsyncpa [#allocation5], 0
    %s16 = scalar_lea.sflag [#allocation5], 1
    %17 = vsyncpa %s16, 0
    loop: start=0, step=1, limit=4
    $region2: #{tpu_custom_call.1} parent=1 // loop_pre_header
      _
    $region3: #{tpu_custom_call.1} parent=1 // loop_header
      %s19 = sphi 0, %s23
      %p20 = scmp.ge.s32.totalorder %s19, 4
      %s26 = sphi 0, %s38
      %s27 = sphi 0, %s34
      %s28 = sphi 0, %s26
      %s29 = sphi 0, %s27
      %s30 = sphi 0, %s28
      %s31 = sphi 0, %s29
      %s43 = sphi 0, %s45
      %s46 = sphi 0, %s43
      %s47 = sphi 0, %s46
      %s63 = sphi 0, %s47
      %s69 = sphi 0, %s71
      %s72 = sphi 0, %s69
      %s73 = sphi 0, %s72
      %s89 = sphi 0, %s73
      %s93 = sphi 0, %s93
      %s95 = sphi 0, %s93
      %s96 = sphi 0, %s95
      %s110 = sphi 0, %s96
      %s114 = sphi 0, %s114
      %s116 = sphi 0, %s114
      %s117 = sphi 0, %s116
      %s131 = sphi 0, %s117
      %s135 = sphi 0, %s135
      %s137 = sphi 0, %s135
      %s138 = sphi 0, %s137
      %s152 = sphi 0, %s138
      %s156 = sphi 0, %s156
      %s158 = sphi 0, %s156
      %s159 = sphi 0, %s158
      %s173 = sphi 0, %s159
      %s179 = sphi 0, %s181
      %s182 = sphi 0, %s179
      %s183 = sphi 0, %s182
      %s199 = sphi 0, %s183
    $region4: #{tpu_custom_call.1} parent=1 // loop_header_branch
      %22 = sbr.rel (%p20) target = $region8
    $region5: #{tpu_custom_call.1} parent=1 // loop_body
      %s24 = ssub.s32 %s19, 1
      %s25 = ssub.s32 %s19, 2
      %s32 = sadd.s32 1, %s27
      %p33 = scmp.ge.s32.totalorder %s32, 1
      %s34 = scalar_select %p33, 0, %s32
      %s35 = sadd.s32 1, %s26
      %s36 = scalar_select %p33, %s35, %s26
      %p37 = scmp.ge.s32.totalorder %s36, 2
      %s38 = scalar_select %p37, 0, %s36
      %s39 = ssub.s32 %s26, %s38
      %s40 = ssub.s32 %s27, %s34
      %s41 = sor.u32 %s39, %s40
      %p42 = scmp.eq.s32.totalorder %s41, 0
      %s44 = sadd.s32 %s43, 1
      %s45 = scalar_select %p42, %s43, %s44
      %p48 = pneg %p42
      %p49 = scmp.eq.s32.totalorder %s19, 1
      %p50 = por %p48, %p49
      %p51 = scmp.ne.s32.totalorder %s43, %s46
      %p52 = scmp.eq.s32.totalorder %s19, 0
      %p53 = por %p51, %p52
      %p54 = scmp.ne.s32.totalorder %s43, %s46
      %p55 = scmp.eq.s32.totalorder %s24, 1
      %p56 = por %p54, %p55
      %p57 = scmp.ne.s32.totalorder %s46, %s47
      %p58 = scmp.eq.s32.totalorder %s24, 0
      %p59 = por %p57, %p58
      %p60 = scmp.ne.s32.totalorder %s46, %s47
      %p61 = scmp.eq.s32.totalorder %s25, 1
      %p62 = por %p60, %p61
      %p64 = scmp.ne.s32.totalorder %s47, %s63
      %p65 = scmp.eq.s32.totalorder %s25, 0
      %p66 = por %p64, %p65
      %s67 = ssub.s32 %s26, %s38
      %p68 = scmp.eq.s32.totalorder %s67, 0
      %s70 = sadd.s32 %s69, 1
      %s71 = scalar_select %p68, %s69, %s70
      %p74 = pneg %p68
      %p75 = scmp.eq.s32.totalorder %s19, 1
      %p76 = por %p74, %p75
      %p77 = scmp.ne.s32.totalorder %s69, %s72
      %p78 = scmp.eq.s32.totalorder %s19, 0
      %p79 = por %p77, %p78
      %p80 = scmp.ne.s32.totalorder %s69, %s72
      %p81 = scmp.eq.s32.totalorder %s24, 1
      %p82 = por %p80, %p81
      %p83 = scmp.ne.s32.totalorder %s72, %s73
      %p84 = scmp.eq.s32.totalorder %s24, 0
      %p85 = por %p83, %p84
      %p86 = scmp.ne.s32.totalorder %s72, %s73
      %p87 = scmp.eq.s32.totalorder %s25, 1
      %p88 = por %p86, %p87
      %p90 = scmp.ne.s32.totalorder %s73, %s89
      %p91 = scmp.eq.s32.totalorder %s25, 0
      %p92 = por %p90, %p91
      %s94 = sadd.s32 %s93, 1
      %p97 = scmp.eq.s32.totalorder %s19, 1
      %p98 = scmp.ne.s32.totalorder %s93, %s95
      %p99 = scmp.eq.s32.totalorder %s19, 0
      %p100 = por %p98, %p99
      %p101 = scmp.ne.s32.totalorder %s93, %s95
      %p102 = scmp.eq.s32.totalorder %s24, 1
      %p103 = por %p101, %p102
      %p104 = scmp.ne.s32.totalorder %s95, %s96
      %p105 = scmp.eq.s32.totalorder %s24, 0
      %p106 = por %p104, %p105
      %p107 = scmp.ne.s32.totalorder %s95, %s96
      %p108 = scmp.eq.s32.totalorder %s25, 1
      %p109 = por %p107, %p108
      %p111 = scmp.ne.s32.totalorder %s96, %s110
      %p112 = scmp.eq.s32.totalorder %s25, 0
      %p113 = por %p111, %p112
      %s115 = sadd.s32 %s114, 1
      %p118 = scmp.eq.s32.totalorder %s19, 1
      %p119 = scmp.ne.s32.totalorder %s114, %s116
      %p120 = scmp.eq.s32.totalorder %s19, 0
      %p121 = por %p119, %p120
      %p122 = scmp.ne.s32.totalorder %s114, %s116
      %p123 = scmp.eq.s32.totalorder %s24, 1
      %p124 = por %p122, %p123
      %p125 = scmp.ne.s32.totalorder %s116, %s117
      %p126 = scmp.eq.s32.totalorder %s24, 0
      %p127 = por %p125, %p126
      %p128 = scmp.ne.s32.totalorder %s116, %s117
      %p129 = scmp.eq.s32.totalorder %s25, 1
      %p130 = por %p128, %p129
      %p132 = scmp.ne.s32.totalorder %s117, %s131
      %p133 = scmp.eq.s32.totalorder %s25, 0
      %p134 = por %p132, %p133
      %s136 = sadd.s32 %s135, 1
      %p139 = scmp.eq.s32.totalorder %s19, 1
      %p140 = scmp.ne.s32.totalorder %s135, %s137
      %p141 = scmp.eq.s32.totalorder %s19, 0
      %p142 = por %p140, %p141
      %p143 = scmp.ne.s32.totalorder %s135, %s137
      %p144 = scmp.eq.s32.totalorder %s24, 1
      %p145 = por %p143, %p144
      %p146 = scmp.ne.s32.totalorder %s137, %s138
      %p147 = scmp.eq.s32.totalorder %s24, 0
      %p148 = por %p146, %p147
      %p149 = scmp.ne.s32.totalorder %s137, %s138
      %p150 = scmp.eq.s32.totalorder %s25, 1
      %p151 = por %p149, %p150
      %p153 = scmp.ne.s32.totalorder %s138, %s152
      %p154 = scmp.eq.s32.totalorder %s25, 0
      %p155 = por %p153, %p154
      %s157 = sadd.s32 %s156, 1
      %p160 = scmp.eq.s32.totalorder %s19, 1
      %p161 = scmp.ne.s32.totalorder %s156, %s158
      %p162 = scmp.eq.s32.totalorder %s19, 0
      %p163 = por %p161, %p162
      %p164 = scmp.ne.s32.totalorder %s156, %s158
      %p165 = scmp.eq.s32.totalorder %s24, 1
      %p166 = por %p164, %p165
      %p167 = scmp.ne.s32.totalorder %s158, %s159
      %p168 = scmp.eq.s32.totalorder %s24, 0
      %p169 = por %p167, %p168
      %p170 = scmp.ne.s32.totalorder %s158, %s159
      %p171 = scmp.eq.s32.totalorder %s25, 1
      %p172 = por %p170, %p171
      %p174 = scmp.ne.s32.totalorder %s159, %s173
      %p175 = scmp.eq.s32.totalorder %s25, 0
      %p176 = por %p174, %p175
      %s177 = ssub.s32 %s26, %s38
      %p178 = scmp.eq.s32.totalorder %s177, 0
      %s180 = sadd.s32 %s179, 1
      %s181 = scalar_select %p178, %s179, %s180
      %p184 = pneg %p178
      %p185 = scmp.eq.s32.totalorder %s19, 1
      %p186 = por %p184, %p185
      %p187 = scmp.ne.s32.totalorder %s179, %s182
      %p188 = scmp.eq.s32.totalorder %s19, 0
      %p189 = por %p187, %p188
      %p190 = scmp.ne.s32.totalorder %s179, %s182
      %p191 = scmp.eq.s32.totalorder %s24, 1
      %p192 = por %p190, %p191
      %p193 = scmp.ne.s32.totalorder %s182, %s183
      %p194 = scmp.eq.s32.totalorder %s24, 0
      %p195 = por %p193, %p194
      %p196 = scmp.ne.s32.totalorder %s182, %s183
      %p197 = scmp.eq.s32.totalorder %s25, 1
      %p198 = por %p196, %p197
      %p200 = scmp.ne.s32.totalorder %s183, %s199
      %p201 = scmp.eq.s32.totalorder %s25, 0
      %p202 = por %p200, %p201
      %p203 = scmp.le.s32.totalorder 1, %s19
      %p204 = scmp.lt.s32.totalorder %s19, 3
      %p205 = pnand %p203, %p204
      %p206 = pneg %p205
      // Predicated region
      $region9: #{tpu_custom_call.1} parent=5 // pred_check
        _
      $region10: #{tpu_custom_call.1} parent=5 // pred_check_branch
        %208 = sbr.rel (%p205) target = $region12
      $region11: #{tpu_custom_call.1} parent=5 // pred_region
        %s209 = ssub.s32 %s19, 1
        // Predicated region
        $region13: #{tpu_custom_call.1} parent=11 // pred_check
          %p210 = pneg %p106
        $region14: #{tpu_custom_call.1} parent=11 // pred_check_branch
          %212 = sbr.rel (%p210) target = $region16
        $region15: #{tpu_custom_call.1} parent=11 // pred_region
          %214 = vsyncadd [#allocation7], 0
          %s215 = sshll.u32 %s2, 4
          %s216 = int_to_ptr.hbm [resolvable:$true] %s215
          %s217 = sshll.u32 [#allocation6], 4
          %s218 = int_to_ptr.vmem [resolvable:$true] %s217
          %223 = dma.hbm_to_vmem [thread:$0]  %s216, 512, %s218, [#allocation7], 128, 128, 8
        $region16: #{tpu_custom_call.1} parent=11 // pred_fallthru
          _
        // Predicated region
        $region17: #{tpu_custom_call.1} parent=11 // pred_check
          %p224 = pneg %p127
        $region18: #{tpu_custom_call.1} parent=11 // pred_check_branch
          %226 = sbr.rel (%p224) target = $region20
        $region19: #{tpu_custom_call.1} parent=11 // pred_region
          _
        $region20: #{tpu_custom_call.1} parent=11 // pred_fallthru
          _
        // Predicated region
        $region21: #{tpu_custom_call.1} parent=11 // pred_check
          %p227 = pneg %p148
        $region22: #{tpu_custom_call.1} parent=11 // pred_check_branch
          %229 = sbr.rel (%p227) target = $region24
        $region23: #{tpu_custom_call.1} parent=11 // pred_region
          %231 = vsyncadd [#allocation7], 0
          %s232 = sshll.u32 %s4, 4
          %s233 = int_to_ptr.hbm [resolvable:$true] %s232
          %s234 = sshll.u32 [#allocation8], 4
          %s235 = int_to_ptr.vmem [resolvable:$true] %s234
          %240 = dma.hbm_to_vmem [thread:$0]  %s233, 512, %s235, [#allocation7], 128, 128, 8
        $region24: #{tpu_custom_call.1} parent=11 // pred_fallthru
          _
        // Predicated region
        $region25: #{tpu_custom_call.1} parent=11 // pred_check
          %p241 = pneg %p169
        $region26: #{tpu_custom_call.1} parent=11 // pred_check_branch
          %243 = sbr.rel (%p241) target = $region28
        $region27: #{tpu_custom_call.1} parent=11 // pred_region
          _
        $region28: #{tpu_custom_call.1} parent=11 // pred_fallthru
          _
      $region12: #{tpu_custom_call.1} parent=5 // pred_fallthru
        _
      %p244 = scmp.lt.s32.totalorder %s19, 2
      // Predicated region
      $region29: #{tpu_custom_call.1} parent=5 // pred_check
        %p245 = pneg %p244
      $region30: #{tpu_custom_call.1} parent=5 // pred_check_branch
        %247 = sbr.rel (%p245) target = $region32
      $region31: #{tpu_custom_call.1} parent=5 // pred_region
        // Predicated region
        $region33: #{tpu_custom_call.1} parent=31 // pred_check
          %p248 = pneg %p53
        $region34: #{tpu_custom_call.1} parent=31 // pred_check_branch
          %250 = sbr.rel (%p248) target = $region36
        $region35: #{tpu_custom_call.1} parent=31 // pred_region
          %s251 = sand.u32 %s43, 1
          %s252 = scalar_lea.sflag [#allocation4], %s251
          %s253 = sand.u32 %s43, 1
          %s254 = smul.addr %s253, 128
          %s255 = scalar_lea.vmem [#allocation3], %s254
          %s256 = smul.u32 8, %s26
          %s257 = smul.u32 2, %s27
          %259 = vsyncadd %s252, 0
          %s260 = smul.addr %s256, 2
          %s261 = sadd.s32 %s257, %s260
          %s262 = smul.addr %s261, 8
          %s263 = scalar_lea.hbm %s0, %s262
          %s264 = sshll.u32 %s263, 4
          %s265 = int_to_ptr.hbm [resolvable:$true] %s264
          %s266 = sshll.u32 %s255, 4
          %s267 = int_to_ptr.vmem [resolvable:$true] %s266
          %272 = dma.hbm_to_vmem [thread:$0]  %s265, 2048, %s267, %s252, 128, 128, 8
        $region36: #{tpu_custom_call.1} parent=31 // pred_fallthru
          _
        // Predicated region
        $region37: #{tpu_custom_call.1} parent=31 // pred_check
          %p273 = pneg %p79
        $region38: #{tpu_custom_call.1} parent=31 // pred_check_branch
          %275 = sbr.rel (%p273) target = $region40
        $region39: #{tpu_custom_call.1} parent=31 // pred_region
          %p276 = scmp.lt.s32.totalorder %s26, 1
          %s277 = scalar_select %p276, %s26, 1
          %s278 = smul.addr %s277, 8
          %s279 = scalar_lea.vmem %s1, %s278
        $region40: #{tpu_custom_call.1} parent=31 // pred_fallthru
          _
      $region32: #{tpu_custom_call.1} parent=5 // pred_fallthru
        _
      %p280 = scmp.le.s32.totalorder 1, %s19
      %p281 = scmp.lt.s32.totalorder %s19, 3
      %p282 = pnand %p280, %p281
      %p283 = pneg %p282
      // Predicated region
      $region41: #{tpu_custom_call.1} parent=5 // pred_check
        _
      $region42: #{tpu_custom_call.1} parent=5 // pred_check_branch
        %285 = sbr.rel (%p282) target = $region44
      $region43: #{tpu_custom_call.1} parent=5 // pred_region
        %s286 = ssub.s32 %s19, 1
        %s287 = sand.u32 %s46, 1
        %s288 = scalar_lea.sflag [#allocation4], %s287
        %s289 = sand.u32 %s46, 1
        %s290 = smul.addr %s289, 128
        %s291 = scalar_lea.vmem [#allocation3], %s290
        // Predicated region
        $region45: #{tpu_custom_call.1} parent=43 // pred_check
          %p292 = pneg %p59
        $region46: #{tpu_custom_call.1} parent=43 // pred_check_branch
          %294 = sbr.rel (%p292) target = $region48
        $region47: #{tpu_custom_call.1} parent=43 // pred_region
          %296 = dma.done %s288, 2048
        $region48: #{tpu_custom_call.1} parent=43 // pred_fallthru
          _
        // Predicated region
        $region49: #{tpu_custom_call.1} parent=43 // pred_check
          %p297 = pneg %p106
        $region50: #{tpu_custom_call.1} parent=43 // pred_check_branch
          %299 = sbr.rel (%p297) target = $region52
        $region51: #{tpu_custom_call.1} parent=43 // pred_region
          %301 = dma.done [#allocation7], 512
        $region52: #{tpu_custom_call.1} parent=43 // pred_fallthru
          _
        // Predicated region
        $region53: #{tpu_custom_call.1} parent=43 // pred_check
          %p302 = pneg %p148
        $region54: #{tpu_custom_call.1} parent=43 // pred_check_branch
          %304 = sbr.rel (%p302) target = $region56
        $region55: #{tpu_custom_call.1} parent=43 // pred_region
          %306 = dma.done [#allocation7], 512
        $region56: #{tpu_custom_call.1} parent=43 // pred_fallthru
          _
        %s307 = sand.u32 %s46, 1
        %s308 = scalar_lea.sflag [#allocation4], %s307
        %s309 = sand.u32 %s46, 1
        %s310 = smul.addr %s309, 128
        %s311 = scalar_lea.vmem [#allocation3], %s310
        %p312 = pneg %p59
        %p313 = pneg %p56
        %p314 = scmp.lt.s32.totalorder %s28, 1
        %s315 = scalar_select %p314, %s28, 1
        %s316 = smul.addr %s315, 8
        %s317 = scalar_lea.vmem %s1, %s316
        %p318 = pneg %p85
        %p319 = pneg %p82
        %p320 = pneg %p106
        %p321 = pneg %p103
        %p322 = pneg %p127
        %p323 = pneg %p124
        %p324 = pneg %p148
        %p325 = pneg %p145
        %p326 = pneg %p169
        %p327 = pneg %p166
        %p328 = pneg %p195
        %p329 = pneg %p192
        %s330 = sand.u32 %s182, 1
        %s331 = scalar_lea.sflag [#allocation5], %s330
        %s332 = sand.u32 %s182, 1
        %s333 = smul.addr %s332, 8
        %s334 = scalar_lea.vmem [#allocation9], %s333
        %s335 = smul.u32 8, %s28
        %s336 = smul.u32 2, %s29
        %p337 = scmp.lt.s32.totalorder %s28, 1
        %s338 = scalar_select %p337, %s28, 1
        %s339 = smul.addr %s338, 8
        %s340 = scalar_lea.vmem %s1, %s339
        %p341 = scmp.eq.s32.totalorder %s29, 0
        // Predicated region
        $region57: #{tpu_custom_call.1} parent=43 // pred_check
          %p342 = pneg %p341
        $region58: #{tpu_custom_call.1} parent=43 // pred_check_branch
          %344 = sbr.rel (%p342) target = $region60
        $region59: #{tpu_custom_call.1} parent=43 // pred_region
          %vm345 = vcmask 261120
          %346 = vst.msk [vmem:[#allocation2] sm:$0xff] %vm345, 0.0
        $region60: #{tpu_custom_call.1} parent=43 // pred_fallthru
          _
        %v347 = vld [vmem:[%s340] sm:$0xff]
        %v348 = vlaneseq
        %v349 = vshrl.u32 %v348, 7
        %v350 = vadd.s32 %v349, 8
        %s351 = smul.u32 %s29, 16
        %v352 = vstv %s351
        %v353 = vadd.s32 %v349, %v352
        %v354 = vadd.s32 %v350, %v352
        %v355 = vrot.slane %v347, 1
        %v356 = vrot.slane %v347, 2
        %v357 = vrot.slane %v347, 3
        %v358 = vrot.slane %v347, 4
        %v359 = vrot.slane %v347, 5
        %v360 = vrot.slane %v347, 6
        %v361 = vrot.slane %v347, 7
        %v362 = vperm.slane %v347, 0
        %v363 = vperm.slane %v355, 0
        %v364 = vperm.slane %v356, 0
        %v365 = vperm.slane %v357, 0
        %v366 = vperm.slane %v358, 0
        %v367 = vperm.slane %v359, 0
        %v368 = vperm.slane %v360, 0
        %v369 = vperm.slane %v361, 0
        %370 = vset.pattern.permute.xlu0 0
        %371 = vperm.xlu0 %370, %v362
        %v372 = vpop.permute.xlu0 %371
        %373 = vset.pattern.permute.xlu0 0
        %374 = vperm.xlu0 %373, %v363
        %v375 = vpop.permute.xlu0 %374
        %376 = vset.pattern.permute.xlu0 0
        %377 = vperm.xlu0 %376, %v364
        %v378 = vpop.permute.xlu0 %377
        %379 = vset.pattern.permute.xlu0 0
        %380 = vperm.xlu0 %379, %v365
        %v381 = vpop.permute.xlu0 %380
        %382 = vset.pattern.permute.xlu0 0
        %383 = vperm.xlu0 %382, %v366
        %v384 = vpop.permute.xlu0 %383
        %385 = vset.pattern.permute.xlu0 0
        %386 = vperm.xlu0 %385, %v367
        %v387 = vpop.permute.xlu0 %386
        %388 = vset.pattern.permute.xlu0 0
        %389 = vperm.xlu0 %388, %v368
        %v390 = vpop.permute.xlu0 %389
        %391 = vset.pattern.permute.xlu0 0
        %392 = vperm.xlu0 %391, %v369
        %v393 = vpop.permute.xlu0 %392
        %vm394 = vcmp.lt.s32.totalorder %v353, %v372
        %vm395 = vcmp.lt.s32.totalorder %v354, %v372
        %vm396 = vcmp.lt.s32.totalorder %v353, %v375
        %vm397 = vcmp.lt.s32.totalorder %v354, %v375
        %vm398 = vcmp.lt.s32.totalorder %v353, %v378
        %vm399 = vcmp.lt.s32.totalorder %v354, %v378
        %vm400 = vcmp.lt.s32.totalorder %v353, %v381
        %vm401 = vcmp.lt.s32.totalorder %v354, %v381
        %vm402 = vcmp.lt.s32.totalorder %v353, %v384
        %vm403 = vcmp.lt.s32.totalorder %v354, %v384
        %vm404 = vcmp.lt.s32.totalorder %v353, %v387
        %vm405 = vcmp.lt.s32.totalorder %v354, %v387
        %vm406 = vcmp.lt.s32.totalorder %v353, %v390
        %vm407 = vcmp.lt.s32.totalorder %v354, %v390
        %vm408 = vcmp.lt.s32.totalorder %v353, %v393
        %vm409 = vcmp.lt.s32.totalorder %v354, %v393
        %v410 = vld [vmem:[#allocation2] sm:$0xff]
        %v411 = vld [vmem:[%s291] sm:$0xff]
        %v412 = vld [vmem:[%s291 + $0x8] sm:$0xff]
        %v413 = vld [vmem:[%s291 + $0x10] sm:$0xff]
        %v414 = vld [vmem:[%s291 + $0x18] sm:$0xff]
        %v415 = vld [vmem:[%s291 + $0x20] sm:$0xff]
        %v416 = vld [vmem:[%s291 + $0x28] sm:$0xff]
        %v417 = vld [vmem:[%s291 + $0x30] sm:$0xff]
        %v418 = vld [vmem:[%s291 + $0x38] sm:$0xff]
        %v419 = vld [vmem:[%s291 + $0x40] sm:$0xff]
        %v420 = vld [vmem:[%s291 + $0x48] sm:$0xff]
        %v421 = vld [vmem:[%s291 + $0x50] sm:$0xff]
        %v422 = vld [vmem:[%s291 + $0x58] sm:$0xff]
        %v423 = vld [vmem:[%s291 + $0x60] sm:$0xff]
        %v424 = vld [vmem:[%s291 + $0x68] sm:$0xff]
        %v425 = vld [vmem:[%s291 + $0x70] sm:$0xff]
        %v426 = vld [vmem:[%s291 + $0x78] sm:$0xff]
        %v427 = vsel %vm394, %v411, 0.0
        %v428 = vsel %vm395, %v412, 0.0
        %v429 = vsel %vm396, %v413, 0.0
        %v430 = vsel %vm397, %v414, 0.0
        %v431 = vsel %vm398, %v415, 0.0
        %v432 = vsel %vm399, %v416, 0.0
        %v433 = vsel %vm400, %v417, 0.0
        %v434 = vsel %vm401, %v418, 0.0
        %v435 = vsel %vm402, %v419, 0.0
        %v436 = vsel %vm403, %v420, 0.0
        %v437 = vsel %vm404, %v421, 0.0
        %v438 = vsel %vm405, %v422, 0.0
        %v439 = vsel %vm406, %v423, 0.0
        %v440 = vsel %vm407, %v424, 0.0
        %v441 = vsel %vm408, %v425, 0.0
        %v442 = vsel %vm409, %v426, 0.0
        %vm443 = vcmask 261120
        %v444 = vsel %vm443, %v427, 0.0
        %v445 = vsel %vm443, %v428, 0.0
        %v446 = vadd.f32 %v444, %v445
        %v447 = vrot.slane %v446, 4
        %v448 = vadd.f32 %v446, %v447
        %v449 = vrot.slane %v448, 2
        %v450 = vadd.f32 %v448, %v449
        %v451 = vrot.slane %v450, 1
        %v452 = vadd.f32 %v450, %v451
        %v453 = vsel %vm443, %v429, 0.0
        %v454 = vsel %vm443, %v430, 0.0
        %v455 = vadd.f32 %v453, %v454
        %v456 = vrot.slane %v455, 4
        %v457 = vadd.f32 %v455, %v456
        %v458 = vrot.slane %v457, 2
        %v459 = vadd.f32 %v457, %v458
        %v460 = vrot.slane %v459, 1
        %v461 = vadd.f32 %v459, %v460
        %v462 = vsel %vm443, %v431, 0.0
        %v463 = vsel %vm443, %v432, 0.0
        %v464 = vadd.f32 %v462, %v463
        %v465 = vrot.slane %v464, 4
        %v466 = vadd.f32 %v464, %v465
        %v467 = vrot.slane %v466, 2
        %v468 = vadd.f32 %v466, %v467
        %v469 = vrot.slane %v468, 1
        %v470 = vadd.f32 %v468, %v469
        %v471 = vsel %vm443, %v433, 0.0
        %v472 = vsel %vm443, %v434, 0.0
        %v473 = vadd.f32 %v471, %v472
        %v474 = vrot.slane %v473, 4
        %v475 = vadd.f32 %v473, %v474
        %v476 = vrot.slane %v475, 2
        %v477 = vadd.f32 %v475, %v476
        %v478 = vrot.slane %v477, 1
        %v479 = vadd.f32 %v477, %v478
        %v480 = vsel %vm443, %v435, 0.0
        %v481 = vsel %vm443, %v436, 0.0
        %v482 = vadd.f32 %v480, %v481
        %v483 = vrot.slane %v482, 4
        %v484 = vadd.f32 %v482, %v483
        %v485 = vrot.slane %v484, 2
        %v486 = vadd.f32 %v484, %v485
        %v487 = vrot.slane %v486, 1
        %v488 = vadd.f32 %v486, %v487
        %v489 = vsel %vm443, %v437, 0.0
        %v490 = vsel %vm443, %v438, 0.0
        %v491 = vadd.f32 %v489, %v490
        %v492 = vrot.slane %v491, 4
        %v493 = vadd.f32 %v491, %v492
        %v494 = vrot.slane %v493, 2
        %v495 = vadd.f32 %v493, %v494
        %v496 = vrot.slane %v495, 1
        %v497 = vadd.f32 %v495, %v496
        %v498 = vsel %vm443, %v439, 0.0
        %v499 = vsel %vm443, %v440, 0.0
        %v500 = vadd.f32 %v498, %v499
        %v501 = vrot.slane %v500, 4
        %v502 = vadd.f32 %v500, %v501
        %v503 = vrot.slane %v502, 2
        %v504 = vadd.f32 %v502, %v503
        %v505 = vrot.slane %v504, 1
        %v506 = vadd.f32 %v504, %v505
        %v507 = vsel %vm443, %v441, 0.0
        %v508 = vsel %vm443, %v442, 0.0
        %v509 = vadd.f32 %v507, %v508
        %v510 = vrot.slane %v509, 4
        %v511 = vadd.f32 %v509, %v510
        %v512 = vrot.slane %v511, 2
        %v513 = vadd.f32 %v511, %v512
        %v514 = vrot.slane %v513, 1
        %v515 = vadd.f32 %v513, %v514
        %vm524 = vcmask 1041409
        %v525 = vsel %vm524, %v461, %v452
        %vm526 = vcmask 1042434
        %v527 = vsel %vm526, %v470, %v525
        %vm528 = vcmask 1043459
        %v529 = vsel %vm528, %v479, %v527
        %vm530 = vcmask 1044484
        %v531 = vsel %vm530, %v488, %v529
        %vm532 = vcmask 1045509
        %v533 = vsel %vm532, %v497, %v531
        %vm534 = vcmask 1046534
        %v535 = vsel %vm534, %v506, %v533
        %vm536 = vcmask 1047559
        %v537 = vsel %vm536, %v515, %v535
        %v539 = vadd.f32 %v410, %v537
        %540 = vst.msk [vmem:[#allocation2] sm:$0xff] %vm443, %v539
        // Predicated region
        $region61: #{tpu_custom_call.1} parent=43 // pred_check
          %p541 = pneg %p341
        $region62: #{tpu_custom_call.1} parent=43 // pred_check_branch
          %543 = sbr.rel (%p541) target = $region64
        $region63: #{tpu_custom_call.1} parent=43 // pred_region
          %v544 = vld [vmem:[#allocation2] sm:$0xff]
          %vm545 = vcmp.gt.s32.totalorder %v347, 1
          %v546 = vsel %vm545, %v347, 1
          %v547 = vcvt.s32.f32 %v546
          %549 = vset.pattern.permute.xlu0 0
          %550 = vperm.xlu0 %549, %v547
          %v551 = vpop.permute.xlu0 %550
          %v553 = vrcp.pop %v551
          %v554 = vmul.f32 %v551, %v553
          %v555 = vsub.f32 1.0, %v554
          %v556 = vmul.f32 %v553, %v555
          %v557 = vadd.f32 %v553, %v556
          %vm558 = vweird.f32 %v551
          %vm559 = vweird.f32 %v553
          %vm560 = vmor %vm558, %vm559
          %v561 = vsel %vm560, %v553, %v557
          %v562 = vand.u32 2147483647, %v551
          %vm563 = vcmp.eq.f32.partialorder %v562, 8.507059e+37
          %v564 = vand.u32 %v551, 2147483648
          %v565 = vor.u32 1.1754944e-38, %v564
          %v566 = vsel %vm563, %v565, %v561
          %v567 = vmul.f32 %v544, %v566
          %v568 = vld [vmem:[#allocation6] sm:$0xff]
          %v569 = vld [vmem:[#allocation6 + $0x8] sm:$0xff]
          %v570 = vld [vmem:[#allocation6 + $0x10] sm:$0xff]
          %v571 = vld [vmem:[#allocation6 + $0x18] sm:$0xff]
          %v572 = vld [vmem:[%s3] sm:$0x1]
          %v574 = vperm.slane %v572, 0
          %v577 = vsel %vm443, %v567, 0
          %579 = vmatpush.msra.mxu0 0.0
          %580 = vmatpush.msra.mxu0 0.0
          %581 = vmatpush.msra.mxu0 0.0
          %582 = vmatpush.msra.mxu0 0.0
          %583 = vmatpush.msra.mxu0 0.0
          %584 = vmatpush.msra.mxu0 0.0
          %585 = vmatpush.msra.mxu0 0.0
          %586 = vmatpush.msra.mxu0 0.0
          %587 = vmatpush.msra.mxu0 0.0
          %588 = vmatpush.msra.mxu0 0.0
          %589 = vmatpush.msra.mxu0 0.0
          %590 = vmatpush.msra.mxu0 0.0
          %591 = vmatpush.msra.mxu0 %v571
          %592 = vmatpush.msra.mxu0 %v570
          %593 = vmatpush.msra.mxu0 %v569
          %594 = vmatpush.msra.mxu0 %v568
          %595 = vmatmul.f32.gmra.mxu0 %v577
          %v596 = vpop.f32.mrf.mxu0
          %v597 = vadd.f32 %v574, %v596
          %598 = vdwg.mxu0
          %v599 = vld [vmem:[#allocation8] sm:$0xff]
          %v600 = vld [vmem:[#allocation8 + $0x8] sm:$0xff]
          %v601 = vld [vmem:[#allocation8 + $0x10] sm:$0xff]
          %v602 = vld [vmem:[#allocation8 + $0x18] sm:$0xff]
          %v603 = vld [vmem:[%s5] sm:$0x1]
          %v605 = vperm.slane %v603, 0
          %v608 = vsel %vm443, %v597, 0
          %610 = vmatpush.msra.mxu0 0.0
          %611 = vmatpush.msra.mxu0 0.0
          %612 = vmatpush.msra.mxu0 0.0
          %613 = vmatpush.msra.mxu0 0.0
          %614 = vmatpush.msra.mxu0 0.0
          %615 = vmatpush.msra.mxu0 0.0
          %616 = vmatpush.msra.mxu0 0.0
          %617 = vmatpush.msra.mxu0 0.0
          %618 = vmatpush.msra.mxu0 0.0
          %619 = vmatpush.msra.mxu0 0.0
          %620 = vmatpush.msra.mxu0 0.0
          %621 = vmatpush.msra.mxu0 0.0
          %622 = vmatpush.msra.mxu0 %v602
          %623 = vmatpush.msra.mxu0 %v601
          %624 = vmatpush.msra.mxu0 %v600
          %625 = vmatpush.msra.mxu0 %v599
          %626 = vmatmul.f32.gmra.mxu0 %v608
          %v627 = vpop.f32.mrf.mxu0
          %v628 = vadd.f32 %v605, %v627
          %629 = vdwg.mxu0
          %630 = vst.msk [vmem:[%s334] sm:$0xff] %vm443, %v628
        $region64: #{tpu_custom_call.1} parent=43 // pred_fallthru
          _
        %s631 = sand.u32 %s182, 1
        %s632 = scalar_lea.sflag [#allocation5], %s631
        %s633 = sand.u32 %s182, 1
        %s634 = smul.addr %s633, 8
        %s635 = scalar_lea.vmem [#allocation9], %s634
        // Predicated region
        $region65: #{tpu_custom_call.1} parent=43 // pred_check
          %p636 = pneg %p192
        $region66: #{tpu_custom_call.1} parent=43 // pred_check_branch
          %638 = sbr.rel (%p636) target = $region68
        $region67: #{tpu_custom_call.1} parent=43 // pred_region
          %640 = vsyncadd %s632, 0
          %s641 = smul.addr %s28, 8
          %s642 = scalar_lea.hbm %s6, %s641
          %s644 = sshll.u32 %s635, 4
          %s645 = int_to_ptr.vmem [resolvable:$true] %s644
          %s646 = sshll.u32 %s642, 4
          %s647 = int_to_ptr.hbm [resolvable:$true] %s646
          %649 = dma.vmem_to_hbm [thread:$0]  %s645, 128, %s647, %s632
        $region68: #{tpu_custom_call.1} parent=43 // pred_fallthru
          _
      $region44: #{tpu_custom_call.1} parent=5 // pred_fallthru
        _
      %p650 = scmp.le.s32.totalorder 2, %s19
      // Predicated region
      $region69: #{tpu_custom_call.1} parent=5 // pred_check
        %p651 = pneg %p650
      $region70: #{tpu_custom_call.1} parent=5 // pred_check_branch
        %653 = sbr.rel (%p651) target = $region72
      $region71: #{tpu_custom_call.1} parent=5 // pred_region
        %s654 = ssub.s32 %s19, 2
        // Predicated region
        $region73: #{tpu_custom_call.1} parent=71 // pred_check
          %p655 = pneg %p198
        $region74: #{tpu_custom_call.1} parent=71 // pred_check_branch
          %657 = sbr.rel (%p655) target = $region76
        $region75: #{tpu_custom_call.1} parent=71 // pred_region
          %s658 = sand.u32 %s183, 1
          %s659 = scalar_lea.sflag [#allocation5], %s658
          %s660 = sand.u32 %s183, 1
          %s661 = smul.addr %s660, 8
          %s662 = scalar_lea.vmem [#allocation9], %s661
          %664 = dma.done %s659, 128
        $region76: #{tpu_custom_call.1} parent=71 // pred_fallthru
          _
      $region72: #{tpu_custom_call.1} parent=5 // pred_fallthru
        _
    $region6: #{tpu_custom_call.1} parent=1 // loop_footer
      %s23 = sadd.s32 1, %s19
    $region7: #{tpu_custom_call.1} parent=1 // loop_footer_branch
      %18 = sbr.rel target = $region3
    $region8: #{tpu_custom_call.1} parent=1 // loop_exit
      _
    %665 = vsyncpa [#allocation4], 1
    %s666 = scalar_lea.sflag [#allocation4], 1
    %667 = vsyncpa %s666, 1
    %668 = vsyncpa [#allocation7], 1
    %669 = vsyncpa [#allocation5], 1
    %s670 = scalar_lea.sflag [#allocation5], 1
    %671 = vsyncpa %s670, 1

// kernel: tpu_custom_call.1
$region0: #{tpu_custom_call.1}
  #allocation0 [shape = 'u32[]', space=smem, size = 0x4, offset = 0x4, fixed_abs, tag = 'smem constant byte address 0x4 - core index']
  #allocation1 [shape = 'u32[72,128]{1,0:T(1,128)}', space=vmem, size = 0x9000, scoped, tag = 'internal scratch']
  #allocation2 [shape = 'f32[8,32]{1,0:T(8,128)}', space=vmem, size = 0x1000, scoped, tag = 'scratch operand']
  %s0 = inlined_call_operand.hbm [shape: f32[16,16,32], index: 0, kind: input, shape index: {}]
  %s1 = inlined_call_operand.vmem [shape: s32[16,1], index: 1, kind: input, shape index: {}]
  %s2 = inlined_call_operand.hbm [shape: f32[32,32], index: 2, kind: input, shape index: {}]
  %s3 = inlined_call_operand.vmem [shape: f32[1,32], index: 3, kind: input, shape index: {}]
  %s4 = inlined_call_operand.hbm [shape: f32[32,32], index: 4, kind: input, shape index: {}]
  %s5 = inlined_call_operand.vmem [shape: f32[1,32], index: 5, kind: input, shape index: {}]
  %s6 = inlined_call_operand.hbm [shape: f32[16,32], index: 6, kind: output, shape index: {}]
  %s7 = sld [smem:[#allocation0]]
  $region77: #{tpu_custom_call.1} parent=0
    _
  %s9 = ssub.s32 1, %s7
  %s10 = scalar_select 0, %s9, %s7
  $region1: #{tpu_custom_call.1} parent=0
    #allocation3 [shape = 'u8[131072]{0}', space=vmem, size = 0x20000, scoped, tag = 'input window, operand 0']
    #allocation4 [shape = 's32[2]{0}', space=sflag, size = 0x8, scoped, tag = 'scoped memory for tpu_custom_call.1']
    #allocation5 [shape = 's32[2]{0}', space=sflag, size = 0x8, scoped, tag = 'scoped memory for tpu_custom_call.1']
    #allocation6 [shape = 'u8[16384]{0}', space=vmem, size = 0x4000, scoped, tag = 'input window, operand 2, single buffered']
    #allocation7 [shape = 's32[1]{0}', space=sflag, size = 0x4, scoped, tag = 'scoped memory for tpu_custom_call.1']
    #allocation8 [shape = 'u8[16384]{0}', space=vmem, size = 0x4000, scoped, tag = 'input window, operand 4, single buffered']
    #allocation9 [shape = 'u8[8192]{0}', space=vmem, size = 0x2000, scoped, tag = 'output window, operand 0']
    %11 = vsyncpa [#allocation4], 0
    %s12 = scalar_lea.sflag [#allocation4], 1
    %13 = vsyncpa %s12, 0
    %14 = vsyncpa [#allocation7], 0
    %15 = vsyncpa [#allocation5], 0
    %s16 = scalar_lea.sflag [#allocation5], 1
    %17 = vsyncpa %s16, 0
    loop: start=0, step=1, limit=4
    $region2: #{tpu_custom_call.1} parent=1 // loop_pre_header
      _
    $region3: #{tpu_custom_call.1} parent=1 // loop_header
      %s19 = sphi 0, %s23
      %p20 = scmp.ge.s32.totalorder %s19, 4
      %s26 = sphi 0, %s38
      %s27 = sphi 0, %s34
      %s28 = sphi 0, %s26
      %s29 = sphi 0, %s27
      %s30 = sphi 0, %s28
      %s31 = sphi 0, %s29
      %s43 = sphi 0, %s45
      %s46 = sphi 0, %s43
      %s47 = sphi 0, %s46
      %s63 = sphi 0, %s47
      %s69 = sphi 0, %s71
      %s72 = sphi 0, %s69
      %s73 = sphi 0, %s72
      %s89 = sphi 0, %s73
      %s93 = sphi 0, %s93
      %s95 = sphi 0, %s93
      %s96 = sphi 0, %s95
      %s110 = sphi 0, %s96
      %s114 = sphi 0, %s114
      %s116 = sphi 0, %s114
      %s117 = sphi 0, %s116
      %s131 = sphi 0, %s117
      %s135 = sphi 0, %s135
      %s137 = sphi 0, %s135
      %s138 = sphi 0, %s137
      %s152 = sphi 0, %s138
      %s156 = sphi 0, %s156
      %s158 = sphi 0, %s156
      %s159 = sphi 0, %s158
      %s173 = sphi 0, %s159
      %s179 = sphi 0, %s181
      %s182 = sphi 0, %s179
      %s183 = sphi 0, %s182
      %s199 = sphi 0, %s183
    $region4: #{tpu_custom_call.1} parent=1 // loop_header_branch
      %22 = sbr.rel (%p20) target = $region8
    $region5: #{tpu_custom_call.1} parent=1 // loop_body
      %s24 = ssub.s32 %s19, 1
      %s25 = ssub.s32 %s19, 2
      %s32 = sadd.s32 1, %s27
      %p33 = scmp.ge.s32.totalorder %s32, 1
      %s34 = scalar_select %p33, 0, %s32
      %s35 = sadd.s32 1, %s26
      %s36 = scalar_select %p33, %s35, %s26
      %p37 = scmp.ge.s32.totalorder %s36, 2
      %s38 = scalar_select %p37, 0, %s36
      %s39 = ssub.s32 %s26, %s38
      %s40 = ssub.s32 %s27, %s34
      %s41 = sor.u32 %s39, %s40
      %p42 = scmp.eq.s32.totalorder %s41, 0
      %s44 = sadd.s32 %s43, 1
      %s45 = scalar_select %p42, %s43, %s44
      %p48 = pneg %p42
      %p49 = scmp.eq.s32.totalorder %s19, 1
      %p50 = por %p48, %p49
      %p51 = scmp.ne.s32.totalorder %s43, %s46
      %p52 = scmp.eq.s32.totalorder %s19, 0
      %p53 = por %p51, %p52
      %p54 = scmp.ne.s32.totalorder %s43, %s46
      %p55 = scmp.eq.s32.totalorder %s24, 1
      %p56 = por %p54, %p55
      %p57 = scmp.ne.s32.totalorder %s46, %s47
      %p58 = scmp.eq.s32.totalorder %s24, 0
      %p59 = por %p57, %p58
      %p60 = scmp.ne.s32.totalorder %s46, %s47
      %p61 = scmp.eq.s32.totalorder %s25, 1
      %p62 = por %p60, %p61
      %p64 = scmp.ne.s32.totalorder %s47, %s63
      %p65 = scmp.eq.s32.totalorder %s25, 0
      %p66 = por %p64, %p65
      %s67 = ssub.s32 %s26, %s38
      %p68 = scmp.eq.s32.totalorder %s67, 0
      %s70 = sadd.s32 %s69, 1
      %s71 = scalar_select %p68, %s69, %s70
      %p74 = pneg %p68
      %p75 = scmp.eq.s32.totalorder %s19, 1
      %p76 = por %p74, %p75
      %p77 = scmp.ne.s32.totalorder %s69, %s72
      %p78 = scmp.eq.s32.totalorder %s19, 0
      %p79 = por %p77, %p78
      %p80 = scmp.ne.s32.totalorder %s69, %s72
      %p81 = scmp.eq.s32.totalorder %s24, 1
      %p82 = por %p80, %p81
      %p83 = scmp.ne.s32.totalorder %s72, %s73
      %p84 = scmp.eq.s32.totalorder %s24, 0
      %p85 = por %p83, %p84
      %p86 = scmp.ne.s32.totalorder %s72, %s73
      %p87 = scmp.eq.s32.totalorder %s25, 1
      %p88 = por %p86, %p87
      %p90 = scmp.ne.s32.totalorder %s73, %s89
      %p91 = scmp.eq.s32.totalorder %s25, 0
      %p92 = por %p90, %p91
      %s94 = sadd.s32 %s93, 1
      %p97 = scmp.eq.s32.totalorder %s19, 1
      %p98 = scmp.ne.s32.totalorder %s93, %s95
      %p99 = scmp.eq.s32.totalorder %s19, 0
      %p100 = por %p98, %p99
      %p101 = scmp.ne.s32.totalorder %s93, %s95
      %p102 = scmp.eq.s32.totalorder %s24, 1
      %p103 = por %p101, %p102
      %p104 = scmp.ne.s32.totalorder %s95, %s96
      %p105 = scmp.eq.s32.totalorder %s24, 0
      %p106 = por %p104, %p105
      %p107 = scmp.ne.s32.totalorder %s95, %s96
      %p108 = scmp.eq.s32.totalorder %s25, 1
      %p109 = por %p107, %p108
      %p111 = scmp.ne.s32.totalorder %s96, %s110
      %p112 = scmp.eq.s32.totalorder %s25, 0
      %p113 = por %p111, %p112
      %s115 = sadd.s32 %s114, 1
      %p118 = scmp.eq.s32.totalorder %s19, 1
      %p119 = scmp.ne.s32.totalorder %s114, %s116
      %p120 = scmp.eq.s32.totalorder %s19, 0
      %p121 = por %p119, %p120
      %p122 = scmp.ne.s32.totalorder %s114, %s116
      %p123 = scmp.eq.s32.totalorder %s24, 1
      %p124 = por %p122, %p123
      %p125 = scmp.ne.s32.totalorder %s116, %s117
      %p126 = scmp.eq.s32.totalorder %s24, 0
      %p127 = por %p125, %p126
      %p128 = scmp.ne.s32.totalorder %s116, %s117
      %p129 = scmp.eq.s32.totalorder %s25, 1
      %p130 = por %p128, %p129
      %p132 = scmp.ne.s32.totalorder %s117, %s131
      %p133 = scmp.eq.s32.totalorder %s25, 0
      %p134 = por %p132, %p133
      %s136 = sadd.s32 %s135, 1
      %p139 = scmp.eq.s32.totalorder %s19, 1
      %p140 = scmp.ne.s32.totalorder %s135, %s137
      %p141 = scmp.eq.s32.totalorder %s19, 0
      %p142 = por %p140, %p141
      %p143 = scmp.ne.s32.totalorder %s135, %s137
      %p144 = scmp.eq.s32.totalorder %s24, 1
      %p145 = por %p143, %p144
      %p146 = scmp.ne.s32.totalorder %s137, %s138
      %p147 = scmp.eq.s32.totalorder %s24, 0
      %p148 = por %p146, %p147
      %p149 = scmp.ne.s32.totalorder %s137, %s138
      %p150 = scmp.eq.s32.totalorder %s25, 1
      %p151 = por %p149, %p150
      %p153 = scmp.ne.s32.totalorder %s138, %s152
      %p154 = scmp.eq.s32.totalorder %s25, 0
      %p155 = por %p153, %p154
      %s157 = sadd.s32 %s156, 1
      %p160 = scmp.eq.s32.totalorder %s19, 1
      %p161 = scmp.ne.s32.totalorder %s156, %s158
      %p162 = scmp.eq.s32.totalorder %s19, 0
      %p163 = por %p161, %p162
      %p164 = scmp.ne.s32.totalorder %s156, %s158
      %p165 = scmp.eq.s32.totalorder %s24, 1
      %p166 = por %p164, %p165
      %p167 = scmp.ne.s32.totalorder %s158, %s159
      %p168 = scmp.eq.s32.totalorder %s24, 0
      %p169 = por %p167, %p168
      %p170 = scmp.ne.s32.totalorder %s158, %s159
      %p171 = scmp.eq.s32.totalorder %s25, 1
      %p172 = por %p170, %p171
      %p174 = scmp.ne.s32.totalorder %s159, %s173
      %p175 = scmp.eq.s32.totalorder %s25, 0
      %p176 = por %p174, %p175
      %s177 = ssub.s32 %s26, %s38
      %p178 = scmp.eq.s32.totalorder %s177, 0
      %s180 = sadd.s32 %s179, 1
      %s181 = scalar_select %p178, %s179, %s180
      %p184 = pneg %p178
      %p185 = scmp.eq.s32.totalorder %s19, 1
      %p186 = por %p184, %p185
      %p187 = scmp.ne.s32.totalorder %s179, %s182
      %p188 = scmp.eq.s32.totalorder %s19, 0
      %p189 = por %p187, %p188
      %p190 = scmp.ne.s32.totalorder %s179, %s182
      %p191 = scmp.eq.s32.totalorder %s24, 1
      %p192 = por %p190, %p191
      %p193 = scmp.ne.s32.totalorder %s182, %s183
      %p194 = scmp.eq.s32.totalorder %s24, 0
      %p195 = por %p193, %p194
      %p196 = scmp.ne.s32.totalorder %s182, %s183
      %p197 = scmp.eq.s32.totalorder %s25, 1
      %p198 = por %p196, %p197
      %p200 = scmp.ne.s32.totalorder %s183, %s199
      %p201 = scmp.eq.s32.totalorder %s25, 0
      %p202 = por %p200, %p201
      %p203 = scmp.le.s32.totalorder 1, %s19
      %p204 = scmp.lt.s32.totalorder %s19, 3
      %p205 = pnand %p203, %p204
      %p206 = pneg %p205
      // Predicated region
      $region9: #{tpu_custom_call.1} parent=5 // pred_check
        _
      $region10: #{tpu_custom_call.1} parent=5 // pred_check_branch
        %208 = sbr.rel (%p205) target = $region12
      $region11: #{tpu_custom_call.1} parent=5 // pred_region
        %s209 = ssub.s32 %s19, 1
        // Predicated region
        $region13: #{tpu_custom_call.1} parent=11 // pred_check
          %p210 = pneg %p106
        $region14: #{tpu_custom_call.1} parent=11 // pred_check_branch
          %212 = sbr.rel (%p210) target = $region16
        $region15: #{tpu_custom_call.1} parent=11 // pred_region
          %214 = vsyncadd [#allocation7], 0
          %s215 = sshll.u32 %s2, 4
          %s216 = int_to_ptr.hbm [resolvable:$true] %s215
          %s217 = sshll.u32 [#allocation6], 4
          %s218 = int_to_ptr.vmem [resolvable:$true] %s217
          %223 = dma.hbm_to_vmem [thread:$0]  %s216, 512, %s218, [#allocation7], 128, 128, 8
        $region16: #{tpu_custom_call.1} parent=11 // pred_fallthru
          _
        // Predicated region
        $region17: #{tpu_custom_call.1} parent=11 // pred_check
          %p224 = pneg %p127
        $region18: #{tpu_custom_call.1} parent=11 // pred_check_branch
          %226 = sbr.rel (%p224) target = $region20
        $region19: #{tpu_custom_call.1} parent=11 // pred_region
          _
        $region20: #{tpu_custom_call.1} parent=11 // pred_fallthru
          _
        // Predicated region
        $region21: #{tpu_custom_call.1} parent=11 // pred_check
          %p227 = pneg %p148
        $region22: #{tpu_custom_call.1} parent=11 // pred_check_branch
          %229 = sbr.rel (%p227) target = $region24
        $region23: #{tpu_custom_call.1} parent=11 // pred_region
          %231 = vsyncadd [#allocation7], 0
          %s232 = sshll.u32 %s4, 4
          %s233 = int_to_ptr.hbm [resolvable:$true] %s232
          %s234 = sshll.u32 [#allocation8], 4
          %s235 = int_to_ptr.vmem [resolvable:$true] %s234
          %240 = dma.hbm_to_vmem [thread:$0]  %s233, 512, %s235, [#allocation7], 128, 128, 8
        $region24: #{tpu_custom_call.1} parent=11 // pred_fallthru
          _
        // Predicated region
        $region25: #{tpu_custom_call.1} parent=11 // pred_check
          %p241 = pneg %p169
        $region26: #{tpu_custom_call.1} parent=11 // pred_check_branch
          %243 = sbr.rel (%p241) target = $region28
        $region27: #{tpu_custom_call.1} parent=11 // pred_region
          _
        $region28: #{tpu_custom_call.1} parent=11 // pred_fallthru
          _
      $region12: #{tpu_custom_call.1} parent=5 // pred_fallthru
        _
      %p244 = scmp.lt.s32.totalorder %s19, 2
      // Predicated region
      $region29: #{tpu_custom_call.1} parent=5 // pred_check
        %p245 = pneg %p244
      $region30: #{tpu_custom_call.1} parent=5 // pred_check_branch
        %247 = sbr.rel (%p245) target = $region32
      $region31: #{tpu_custom_call.1} parent=5 // pred_region
        // Predicated region
        $region33: #{tpu_custom_call.1} parent=31 // pred_check
          %p248 = pneg %p53
        $region34: #{tpu_custom_call.1} parent=31 // pred_check_branch
          %250 = sbr.rel (%p248) target = $region36
        $region35: #{tpu_custom_call.1} parent=31 // pred_region
          %s251 = sand.u32 %s43, 1
          %s252 = scalar_lea.sflag [#allocation4], %s251
          %s253 = sand.u32 %s43, 1
          %s254 = smul.addr %s253, 128
          %s255 = scalar_lea.vmem [#allocation3], %s254
          %s256 = smul.u32 8, %s26
          %s257 = smul.u32 2, %s27
          %259 = vsyncadd %s252, 0
          %s260 = smul.addr %s256, 2
          %s261 = sadd.s32 %s257, %s260
          %s262 = smul.addr %s261, 8
          %s263 = scalar_lea.hbm %s0, %s262
          %s264 = sshll.u32 %s263, 4
          %s265 = int_to_ptr.hbm [resolvable:$true] %s264
          %s266 = sshll.u32 %s255, 4
          %s267 = int_to_ptr.vmem [resolvable:$true] %s266
          %272 = dma.hbm_to_vmem [thread:$0]  %s265, 2048, %s267, %s252, 128, 128, 8
        $region36: #{tpu_custom_call.1} parent=31 // pred_fallthru
          _
        // Predicated region
        $region37: #{tpu_custom_call.1} parent=31 // pred_check
          %p273 = pneg %p79
        $region38: #{tpu_custom_call.1} parent=31 // pred_check_branch
          %275 = sbr.rel (%p273) target = $region40
        $region39: #{tpu_custom_call.1} parent=31 // pred_region
          %p276 = scmp.lt.s32.totalorder %s26, 1
          %s277 = scalar_select %p276, %s26, 1
          %s278 = smul.addr %s277, 8
          %s279 = scalar_lea.vmem %s1, %s278
        $region40: #{tpu_custom_call.1} parent=31 // pred_fallthru
          _
      $region32: #{tpu_custom_call.1} parent=5 // pred_fallthru
        _
      %p280 = scmp.le.s32.totalorder 1, %s19
      %p281 = scmp.lt.s32.totalorder %s19, 3
      %p282 = pnand %p280, %p281
      %p283 = pneg %p282
      // Predicated region
      $region41: #{tpu_custom_call.1} parent=5 // pred_check
        _
      $region42: #{tpu_custom_call.1} parent=5 // pred_check_branch
        %285 = sbr.rel (%p282) target = $region44
      $region43: #{tpu_custom_call.1} parent=5 // pred_region
        %s286 = ssub.s32 %s19, 1
        %s287 = sand.u32 %s46, 1
        %s288 = scalar_lea.sflag [#allocation4], %s287
        %s289 = sand.u32 %s46, 1
        %s290 = smul.addr %s289, 128
        %s291 = scalar_lea.vmem [#allocation3], %s290
        // Predicated region
        $region45: #{tpu_custom_call.1} parent=43 // pred_check
          %p292 = pneg %p59
        $region46: #{tpu_custom_call.1} parent=43 // pred_check_branch
          %294 = sbr.rel (%p292) target = $region48
        $region47: #{tpu_custom_call.1} parent=43 // pred_region
          %296 = dma.done %s288, 2048
        $region48: #{tpu_custom_call.1} parent=43 // pred_fallthru
          _
        // Predicated region
        $region49: #{tpu_custom_call.1} parent=43 // pred_check
          %p297 = pneg %p106
        $region50: #{tpu_custom_call.1} parent=43 // pred_check_branch
          %299 = sbr.rel (%p297) target = $region52
        $region51: #{tpu_custom_call.1} parent=43 // pred_region
          %301 = dma.done [#allocation7], 512
        $region52: #{tpu_custom_call.1} parent=43 // pred_fallthru
          _
        // Predicated region
        $region53: #{tpu_custom_call.1} parent=43 // pred_check
          %p302 = pneg %p148
        $region54: #{tpu_custom_call.1} parent=43 // pred_check_branch
          %304 = sbr.rel (%p302) target = $region56
        $region55: #{tpu_custom_call.1} parent=43 // pred_region
          %306 = dma.done [#allocation7], 512
        $region56: #{tpu_custom_call.1} parent=43 // pred_fallthru
          _
        %s307 = sand.u32 %s46, 1
        %s308 = scalar_lea.sflag [#allocation4], %s307
        %s309 = sand.u32 %s46, 1
        %s310 = smul.addr %s309, 128
        %s311 = scalar_lea.vmem [#allocation3], %s310
        %p312 = pneg %p59
        %p313 = pneg %p56
        %p314 = scmp.lt.s32.totalorder %s28, 1
        %s315 = scalar_select %p314, %s28, 1
        %s316 = smul.addr %s315, 8
        %s317 = scalar_lea.vmem %s1, %s316
        %p318 = pneg %p85
        %p319 = pneg %p82
        %p320 = pneg %p106
        %p321 = pneg %p103
        %p322 = pneg %p127
        %p323 = pneg %p124
        %p324 = pneg %p148
        %p325 = pneg %p145
        %p326 = pneg %p169
        %p327 = pneg %p166
        %p328 = pneg %p195
        %p329 = pneg %p192
        %s330 = sand.u32 %s182, 1
        %s331 = scalar_lea.sflag [#allocation5], %s330
        %s332 = sand.u32 %s182, 1
        %s333 = smul.addr %s332, 8
        %s334 = scalar_lea.vmem [#allocation9], %s333
        %s335 = smul.u32 8, %s28
        %s336 = smul.u32 2, %s29
        %p337 = scmp.lt.s32.totalorder %s28, 1
        %s338 = scalar_select %p337, %s28, 1
        %s339 = smul.addr %s338, 8
        %s340 = scalar_lea.vmem %s1, %s339
        %p341 = scmp.eq.s32.totalorder %s29, 0
        // Predicated region
        $region57: #{tpu_custom_call.1} parent=43 // pred_check
          %p342 = pneg %p341
        $region58: #{tpu_custom_call.1} parent=43 // pred_check_branch
          %344 = sbr.rel (%p342) target = $region60
        $region59: #{tpu_custom_call.1} parent=43 // pred_region
          %vm345 = vcmask 261120
          %346 = vst.msk [vmem:[#allocation2] sm:$0xff] %vm345, 0.0
        $region60: #{tpu_custom_call.1} parent=43 // pred_fallthru
          _
        %v347 = vld [vmem:[%s340] sm:$0xff]
        %v348 = vlaneseq
        %v349 = vshrl.u32 %v348, 7
        %v350 = vadd.s32 %v349, 8
        %s351 = smul.u32 %s29, 16
        %v352 = vstv %s351
        %v353 = vadd.s32 %v349, %v352
        %v354 = vadd.s32 %v350, %v352
        %v355 = vrot.slane %v347, 1
        %v356 = vrot.slane %v347, 2
        %v357 = vrot.slane %v347, 3
        %v358 = vrot.slane %v347, 4
        %v359 = vrot.slane %v347, 5
        %v360 = vrot.slane %v347, 6
        %v361 = vrot.slane %v347, 7
        %v362 = vperm.slane %v347, 0
        %v363 = vperm.slane %v355, 0
        %v364 = vperm.slane %v356, 0
        %v365 = vperm.slane %v357, 0
        %v366 = vperm.slane %v358, 0
        %v367 = vperm.slane %v359, 0
        %v368 = vperm.slane %v360, 0
        %v369 = vperm.slane %v361, 0
        %370 = vset.pattern.permute.xlu0 0
        %371 = vperm.xlu0 %370, %v362
        %v372 = vpop.permute.xlu0 %371
        %373 = vset.pattern.permute.xlu0 0
        %374 = vperm.xlu0 %373, %v363
        %v375 = vpop.permute.xlu0 %374
        %376 = vset.pattern.permute.xlu0 0
        %377 = vperm.xlu0 %376, %v364
        %v378 = vpop.permute.xlu0 %377
        %379 = vset.pattern.permute.xlu0 0
        %380 = vperm.xlu0 %379, %v365
        %v381 = vpop.permute.xlu0 %380
        %382 = vset.pattern.permute.xlu0 0
        %383 = vperm.xlu0 %382, %v366
        %v384 = vpop.permute.xlu0 %383
        %385 = vset.pattern.permute.xlu0 0
        %386 = vperm.xlu0 %385, %v367
        %v387 = vpop.permute.xlu0 %386
        %388 = vset.pattern.permute.xlu0 0
        %389 = vperm.xlu0 %388, %v368
        %v390 = vpop.permute.xlu0 %389
        %391 = vset.pattern.permute.xlu0 0
        %392 = vperm.xlu0 %391, %v369
        %v393 = vpop.permute.xlu0 %392
        %vm394 = vcmp.lt.s32.totalorder %v353, %v372
        %vm395 = vcmp.lt.s32.totalorder %v354, %v372
        %vm396 = vcmp.lt.s32.totalorder %v353, %v375
        %vm397 = vcmp.lt.s32.totalorder %v354, %v375
        %vm398 = vcmp.lt.s32.totalorder %v353, %v378
        %vm399 = vcmp.lt.s32.totalorder %v354, %v378
        %vm400 = vcmp.lt.s32.totalorder %v353, %v381
        %vm401 = vcmp.lt.s32.totalorder %v354, %v381
        %vm402 = vcmp.lt.s32.totalorder %v353, %v384
        %vm403 = vcmp.lt.s32.totalorder %v354, %v384
        %vm404 = vcmp.lt.s32.totalorder %v353, %v387
        %vm405 = vcmp.lt.s32.totalorder %v354, %v387
        %vm406 = vcmp.lt.s32.totalorder %v353, %v390
        %vm407 = vcmp.lt.s32.totalorder %v354, %v390
        %vm408 = vcmp.lt.s32.totalorder %v353, %v393
        %vm409 = vcmp.lt.s32.totalorder %v354, %v393
        %v410 = vld [vmem:[#allocation2] sm:$0xff]
        %v411 = vld [vmem:[%s291] sm:$0xff]
        %v412 = vld [vmem:[%s291 + $0x8] sm:$0xff]
        %v413 = vld [vmem:[%s291 + $0x10] sm:$0xff]
        %v414 = vld [vmem:[%s291 + $0x18] sm:$0xff]
        %v415 = vld [vmem:[%s291 + $0x20] sm:$0xff]
        %v416 = vld [vmem:[%s291 + $0x28] sm:$0xff]
        %v417 = vld [vmem:[%s291 + $0x30] sm:$0xff]
        %v418 = vld [vmem:[%s291 + $0x38] sm:$0xff]
        %v419 = vld [vmem:[%s291 + $0x40] sm:$0xff]
        %v420 = vld [vmem:[%s291 + $0x48] sm:$0xff]
        %v421 = vld [vmem:[%s291 + $0x50] sm:$0xff]
        %v422 = vld [vmem:[%s291 + $0x58] sm:$0xff]
        %v423 = vld [vmem:[%s291 + $0x60] sm:$0xff]
        %v424 = vld [vmem:[%s291 + $0x68] sm:$0xff]
        %v425 = vld [vmem:[%s291 + $0x70] sm:$0xff]
        %v426 = vld [vmem:[%s291 + $0x78] sm:$0xff]
        %v427 = vsel %vm394, %v411, 0.0
        %v428 = vsel %vm395, %v412, 0.0
        %v429 = vsel %vm396, %v413, 0.0
        %v430 = vsel %vm397, %v414, 0.0
        %v431 = vsel %vm398, %v415, 0.0
        %v432 = vsel %vm399, %v416, 0.0
        %v433 = vsel %vm400, %v417, 0.0
        %v434 = vsel %vm401, %v418, 0.0
        %v435 = vsel %vm402, %v419, 0.0
        %v436 = vsel %vm403, %v420, 0.0
        %v437 = vsel %vm404, %v421, 0.0
        %v438 = vsel %vm405, %v422, 0.0
        %v439 = vsel %vm406, %v423, 0.0
        %v440 = vsel %vm407, %v424, 0.0
        %v441 = vsel %vm408, %v425, 0.0
        %v442 = vsel %vm409, %v426, 0.0
        %vm443 = vcmask 261120
        %v444 = vsel %vm443, %v427, 0.0
        %v445 = vsel %vm443, %v428, 0.0
        %v446 = vadd.f32 %v444, %v445
        %v447 = vrot.slane %v446, 4
        %v448 = vadd.f32 %v446, %v447
        %v449 = vrot.slane %v448, 2
        %v450 = vadd.f32 %v448, %v449
        %v451 = vrot.slane %v450, 1
        %v452 = vadd.f32 %v450, %v451
        %v453 = vsel %vm443, %v429, 0.0
        %v454 = vsel %vm443, %v430, 0.0
        %v455 = vadd.f32 %v453, %v454
        %v456 = vrot.slane %v455, 4
        %v457 = vadd.f32 %v455, %v456
        %v458 = vrot.slane %v457, 2
        %v459 = vadd.f32 %v457, %v458
        %v460 = vrot.slane %v459, 1
        %v461 = vadd.f32 %v459, %v460
        %v462 = vsel %vm443, %v431, 0.0
        %v463 = vsel %vm443, %v432, 0.0
        %v464 = vadd.f32 %v462, %v463
        %v465 = vrot.slane %v464, 4
        %v466 = vadd.f32 %v464, %v465
        %v467 = vrot.slane %v466, 2
        %v468 = vadd.f32 %v466, %v467
        %v469 = vrot.slane %v468, 1
        %v470 = vadd.f32 %v468, %v469
        %v471 = vsel %vm443, %v433, 0.0
        %v472 = vsel %vm443, %v434, 0.0
        %v473 = vadd.f32 %v471, %v472
        %v474 = vrot.slane %v473, 4
        %v475 = vadd.f32 %v473, %v474
        %v476 = vrot.slane %v475, 2
        %v477 = vadd.f32 %v475, %v476
        %v478 = vrot.slane %v477, 1
        %v479 = vadd.f32 %v477, %v478
        %v480 = vsel %vm443, %v435, 0.0
        %v481 = vsel %vm443, %v436, 0.0
        %v482 = vadd.f32 %v480, %v481
        %v483 = vrot.slane %v482, 4
        %v484 = vadd.f32 %v482, %v483
        %v485 = vrot.slane %v484, 2
        %v486 = vadd.f32 %v484, %v485
        %v487 = vrot.slane %v486, 1
        %v488 = vadd.f32 %v486, %v487
        %v489 = vsel %vm443, %v437, 0.0
        %v490 = vsel %vm443, %v438, 0.0
        %v491 = vadd.f32 %v489, %v490
        %v492 = vrot.slane %v491, 4
        %v493 = vadd.f32 %v491, %v492
        %v494 = vrot.slane %v493, 2
        %v495 = vadd.f32 %v493, %v494
        %v496 = vrot.slane %v495, 1
        %v497 = vadd.f32 %v495, %v496
        %v498 = vsel %vm443, %v439, 0.0
        %v499 = vsel %vm443, %v440, 0.0
        %v500 = vadd.f32 %v498, %v499
        %v501 = vrot.slane %v500, 4
        %v502 = vadd.f32 %v500, %v501
        %v503 = vrot.slane %v502, 2
        %v504 = vadd.f32 %v502, %v503
        %v505 = vrot.slane %v504, 1
        %v506 = vadd.f32 %v504, %v505
        %v507 = vsel %vm443, %v441, 0.0
        %v508 = vsel %vm443, %v442, 0.0
        %v509 = vadd.f32 %v507, %v508
        %v510 = vrot.slane %v509, 4
        %v511 = vadd.f32 %v509, %v510
        %v512 = vrot.slane %v511, 2
        %v513 = vadd.f32 %v511, %v512
        %v514 = vrot.slane %v513, 1
        %v515 = vadd.f32 %v513, %v514
        %vm524 = vcmask 1041409
        %v525 = vsel %vm524, %v461, %v452
        %vm526 = vcmask 1042434
        %v527 = vsel %vm526, %v470, %v525
        %vm528 = vcmask 1043459
        %v529 = vsel %vm528, %v479, %v527
        %vm530 = vcmask 1044484
        %v531 = vsel %vm530, %v488, %v529
        %vm532 = vcmask 1045509
        %v533 = vsel %vm532, %v497, %v531
        %vm534 = vcmask 1046534
        %v535 = vsel %vm534, %v506, %v533
        %vm536 = vcmask 1047559
        %v537 = vsel %vm536, %v515, %v535
        %v539 = vadd.f32 %v410, %v537
        %540 = vst.msk [vmem:[#allocation2] sm:$0xff] %vm443, %v539
        // Predicated region
        $region61: #{tpu_custom_call.1} parent=43 // pred_check
          %p541 = pneg %p341
        $region62: #{tpu_custom_call.1} parent=43 // pred_check_branch
          %543 = sbr.rel (%p541) target = $region64
        $region63: #{tpu_custom_call.1} parent=43 // pred_region
          %v544 = vld [vmem:[#allocation2] sm:$0xff]
          %vm545 = vcmp.gt.s32.totalorder %v347, 1
          %v546 = vsel %vm545, %v347, 1
          %v547 = vcvt.s32.f32 %v546
          %549 = vset.pattern.permute.xlu0 0
          %550 = vperm.xlu0 %549, %v547
          %v551 = vpop.permute.xlu0 %550
          %v553 = vrcp.pop %v551
          %v554 = vmul.f32 %v551, %v553
          %v555 = vsub.f32 1.0, %v554
          %v556 = vmul.f32 %v553, %v555
          %v557 = vadd.f32 %v553, %v556
          %vm558 = vweird.f32 %v551
          %vm559 = vweird.f32 %v553
          %vm560 = vmor %vm558, %vm559
          %v561 = vsel %vm560, %v553, %v557
          %v562 = vand.u32 2147483647, %v551
          %vm563 = vcmp.eq.f32.partialorder %v562, 8.507059e+37
          %v564 = vand.u32 %v551, 2147483648
          %v565 = vor.u32 1.1754944e-38, %v564
          %v566 = vsel %vm563, %v565, %v561
          %v567 = vmul.f32 %v544, %v566
          %v568 = vld [vmem:[#allocation6] sm:$0xff]
          %v569 = vld [vmem:[#allocation6 + $0x8] sm:$0xff]
          %v570 = vld [vmem:[#allocation6 + $0x10] sm:$0xff]
          %v571 = vld [vmem:[#allocation6 + $0x18] sm:$0xff]
          %v572 = vld [vmem:[%s3] sm:$0x1]
          %v574 = vperm.slane %v572, 0
          %v577 = vsel %vm443, %v567, 0
          %579 = vmatpush.msra.mxu0 0.0
          %580 = vmatpush.msra.mxu0 0.0
          %581 = vmatpush.msra.mxu0 0.0
          %582 = vmatpush.msra.mxu0 0.0
          %583 = vmatpush.msra.mxu0 0.0
          %584 = vmatpush.msra.mxu0 0.0
          %585 = vmatpush.msra.mxu0 0.0
          %586 = vmatpush.msra.mxu0 0.0
          %587 = vmatpush.msra.mxu0 0.0
          %588 = vmatpush.msra.mxu0 0.0
          %589 = vmatpush.msra.mxu0 0.0
          %590 = vmatpush.msra.mxu0 0.0
          %591 = vmatpush.msra.mxu0 %v571
          %592 = vmatpush.msra.mxu0 %v570
          %593 = vmatpush.msra.mxu0 %v569
          %594 = vmatpush.msra.mxu0 %v568
          %595 = vmatmul.f32.gmra.mxu0 %v577
          %v596 = vpop.f32.mrf.mxu0
          %v597 = vadd.f32 %v574, %v596
          %598 = vdwg.mxu0
          %v599 = vld [vmem:[#allocation8] sm:$0xff]
          %v600 = vld [vmem:[#allocation8 + $0x8] sm:$0xff]
          %v601 = vld [vmem:[#allocation8 + $0x10] sm:$0xff]
          %v602 = vld [vmem:[#allocation8 + $0x18] sm:$0xff]
          %v603 = vld [vmem:[%s5] sm:$0x1]
          %v605 = vperm.slane %v603, 0
          %v608 = vsel %vm443, %v597, 0
          %610 = vmatpush.msra.mxu0 0.0
          %611 = vmatpush.msra.mxu0 0.0
          %612 = vmatpush.msra.mxu0 0.0
          %613 = vmatpush.msra.mxu0 0.0
          %614 = vmatpush.msra.mxu0 0.0
          %615 = vmatpush.msra.mxu0 0.0
          %616 = vmatpush.msra.mxu0 0.0
          %617 = vmatpush.msra.mxu0 0.0
          %618 = vmatpush.msra.mxu0 0.0
          %619 = vmatpush.msra.mxu0 0.0
          %620 = vmatpush.msra.mxu0 0.0
          %621 = vmatpush.msra.mxu0 0.0
          %622 = vmatpush.msra.mxu0 %v602
          %623 = vmatpush.msra.mxu0 %v601
          %624 = vmatpush.msra.mxu0 %v600
          %625 = vmatpush.msra.mxu0 %v599
          %626 = vmatmul.f32.gmra.mxu0 %v608
          %v627 = vpop.f32.mrf.mxu0
          %v628 = vadd.f32 %v605, %v627
          %629 = vdwg.mxu0
          %630 = vst.msk [vmem:[%s334] sm:$0xff] %vm443, %v628
        $region64: #{tpu_custom_call.1} parent=43 // pred_fallthru
          _
        %s631 = sand.u32 %s182, 1
        %s632 = scalar_lea.sflag [#allocation5], %s631
        %s633 = sand.u32 %s182, 1
        %s634 = smul.addr %s633, 8
        %s635 = scalar_lea.vmem [#allocation9], %s634
        // Predicated region
        $region65: #{tpu_custom_call.1} parent=43 // pred_check
          %p636 = pneg %p192
        $region66: #{tpu_custom_call.1} parent=43 // pred_check_branch
          %638 = sbr.rel (%p636) target = $region68
        $region67: #{tpu_custom_call.1} parent=43 // pred_region
          %640 = vsyncadd %s632, 0
          %s641 = smul.addr %s28, 8
          %s642 = scalar_lea.hbm %s6, %s641
          %s644 = sshll.u32 %s635, 4
          %s645 = int_to_ptr.vmem [resolvable:$true] %s644
          %s646 = sshll.u32 %s642, 4
          %s647 = int_to_ptr.hbm [resolvable:$true] %s646
          %649 = dma.vmem_to_hbm [thread:$0]  %s645, 128, %s647, %s632
        $region68: #{tpu_custom_call.1} parent=43 // pred_fallthru
          _
      $region44: #{tpu_custom_call.1} parent=5 // pred_fallthru
        _
      %p650 = scmp.le.s32.totalorder 2, %s19
      // Predicated region
      $region69: #{tpu_custom_call.1} parent=5 // pred_check
        %p651 = pneg %p650
      $region70: #{tpu_custom_call.1} parent=5 // pred_check_branch
        %653 = sbr.rel (%p651) target = $region72
      $region71: #{tpu_custom_call.1} parent=5 // pred_region
        %s654 = ssub.s32 %s19, 2
        // Predicated region
        $region73: #{tpu_custom_call.1} parent=71 // pred_check
          %p655 = pneg %p198
        $region74: #{tpu_custom_call.1} parent=71 // pred_check_branch
          %657 = sbr.rel (%p655) target = $region76
        $region75: #{tpu_custom_call.1} parent=71 // pred_region
          %s658 = sand.u32 %s183, 1
          %s659 = scalar_lea.sflag [#allocation5], %s658
          %s660 = sand.u32 %s183, 1
          %s661 = smul.addr %s660, 8
          %s662 = scalar_lea.vmem [#allocation9], %s661
          %664 = dma.done %s659, 128
        $region76: #{tpu_custom_call.1} parent=71 // pred_fallthru
          _
      $region72: #{tpu_custom_call.1} parent=5 // pred_fallthru
        _
    $region6: #{tpu_custom_call.1} parent=1 // loop_footer
      %s23 = sadd.s32 1, %s19
    $region7: #{tpu_custom_call.1} parent=1 // loop_footer_branch
      %18 = sbr.rel target = $region3
    $region8: #{tpu_custom_call.1} parent=1 // loop_exit
      _
    %665 = vsyncpa [#allocation4], 1
    %s666 = scalar_lea.sflag [#allocation4], 1
    %667 = vsyncpa %s666, 1
    %668 = vsyncpa [#allocation7], 1
    %669 = vsyncpa [#allocation5], 1
    %s670 = scalar_lea.sflag [#allocation5], 1
    %671 = vsyncpa %s670, 1

</llo_original>
